<compile_context>
chip_gen: v5e
topology: v5e:2x2
jax: 0.10.0
libtpu: 0.0.40
codegen_flags: <defaults>
</compile_context>

<pallas_src>
import math

import jax
import jax.numpy as jnp
from jax.experimental import pallas as pl
from jax.experimental.pallas import tpu as pltpu

HIDDEN_SIZE = 10
INPUT_SIZE = 1
NUM_LAYERS = 10
BATCH = 8
MAX_LANE_BLOCK = 1024   # per-grid-step batch block (lanes), multiple of 128


def mlp_kernel(x_ref, w0_ref, b0_ref, w_ref, b_ref, wo_ref, bo_ref, o_ref):
    # x_ref : (1, BB)            input batch row (batch on lanes)
    # w0_ref: (H, 1)             layer-0 weight column (PyTorch (out, in)=(10,1))
    # b0_ref: (H, 1)             layer-0 bias column
    # w_ref : (L-1, H, H)        hidden weights, PyTorch (out, in) orientation
    # b_ref : (H, L-1)           hidden bias columns (b_ref[:, l] = bias of layer l+1)
    # wo_ref: (H, 1)             output weight column
    # bo_ref: (1, 1)             output bias
    # o_ref : (1, BB)            lane-packed output row
    hidden = w0_ref.shape[0]

    # ---- layer 0 (peeled: INPUT_SIZE == 1 -> a single MAC) ----------------
    z = w0_ref[...] * x_ref[...] + b0_ref[...]        # (H,1)*(1,BB)+(H,1) -> (H,BB)
    h = jnp.tanh(z * 0.5) * 0.5 + 0.5                 # sigmoid via one EUP tanh

    # ---- hidden layers 1 .. NUM_LAYERS-1 (features on sublanes) -----------
    num_hidden = w_ref.shape[0]
    for l in range(num_hidden):                       # static, fully unrolled
        wl = w_ref[l]                                 # (H, H): (out, in)
        # 10 VPU outer-product terms; the weight-column lane-broadcasts are
        # activation-independent (off the serial critical path), the h-row
        # slices are cheap sublane broadcasts.
        terms = [wl[:, i:i + 1] * h[i:i + 1, :] for i in range(hidden)]
        # tree accumulation -> log-depth VALU chain instead of 10-deep chain
        while len(terms) > 1:
            nxt = [terms[j] + terms[j + 1] for j in range(0, len(terms) - 1, 2)]
            if len(terms) % 2:
                nxt.append(terms[-1])
            terms = nxt
        z = terms[0] + b_ref[:, l:l + 1]              # (H,BB) + (H,1)
        h = jnp.tanh(z * 0.5) * 0.5 + 0.5

    # ---- output layer Linear(H -> 1): elementwise mul + sublane reduce ----
    y = jnp.sum(h * wo_ref[...], axis=0, keepdims=True) + bo_ref[...]   # (1, BB)
    o_ref[...] = y.astype(o_ref.dtype)                # lane-dense (1, BB) store


def net_forward(x, w0, b0, w_hidden, b_hidden, w_out, b_out):
    """x: (B, INPUT_SIZE) -> (B, 1), matching Net.forward."""
    B = x.shape[0]
    # batch lives on the lane axis: lane-aligned block, capped for pipelining
    BB = min(128 * ((B + 127) // 128), MAX_LANE_BLOCK)
    B_pad = BB * ((B + BB - 1) // BB)

    x_row = jnp.pad(x[:, 0].astype(jnp.float32), (0, B_pad - B)).reshape(1, B_pad)
    wo_col = w_out.T.astype(jnp.float32)              # (H, 1) output-weight column

    grid = (B_pad // BB,)
    out = pl.pallas_call(
        mlp_kernel,
        out_shape=jax.ShapeDtypeStruct((1, B_pad), jnp.float32),
        grid=grid,
        in_specs=[
            pl.BlockSpec((1, BB), lambda i: (0, i)),
            pl.BlockSpec((HIDDEN_SIZE, 1), lambda i: (0, 0)),
            pl.BlockSpec((HIDDEN_SIZE, 1), lambda i: (0, 0)),
            pl.BlockSpec((NUM_LAYERS - 1, HIDDEN_SIZE, HIDDEN_SIZE),
                         lambda i: (0, 0, 0)),
            pl.BlockSpec((HIDDEN_SIZE, NUM_LAYERS - 1), lambda i: (0, 0)),
            pl.BlockSpec((HIDDEN_SIZE, 1), lambda i: (0, 0)),
            pl.BlockSpec((1, 1), lambda i: (0, 0)),
        ],
        out_specs=pl.BlockSpec((1, BB), lambda i: (0, i)),
        compiler_params=pltpu.CompilerParams(dimension_semantics=("parallel",)),
    )(x_row, w0, b0, w_hidden, b_hidden, wo_col, b_out)
    return out[0, :B].reshape(B, 1)


def init_params(key):
    """Deterministic init mimicking nn.Linear's U(-1/sqrt(fan_in), 1/sqrt(fan_in))."""
    keys = jax.random.split(key, 2 * (NUM_LAYERS + 1))

    bound0 = 1.0 / math.sqrt(INPUT_SIZE)
    w0 = jax.random.uniform(keys[0], (HIDDEN_SIZE, INPUT_SIZE), jnp.float32,
                            -bound0, bound0)                       # (10, 1) (out, in)
    b0 = jax.random.uniform(keys[1], (HIDDEN_SIZE, 1), jnp.float32,
                            -bound0, bound0)                       # (10, 1) column

    bound_h = 1.0 / math.sqrt(HIDDEN_SIZE)
    w_list, b_list = [], []
    for l in range(1, NUM_LAYERS):
        w_list.append(jax.random.uniform(keys[2 * l],
                                         (HIDDEN_SIZE, HIDDEN_SIZE), jnp.float32,
                                         -bound_h, bound_h))       # (out, in)
        b_list.append(jax.random.uniform(keys[2 * l + 1],
                                         (HIDDEN_SIZE,), jnp.float32,
                                         -bound_h, bound_h))
    w_hidden = jnp.stack(w_list)                                   # (9, 10, 10)
    b_hidden = jnp.stack(b_list, axis=1)                           # (10, 9) columns

    w_out = jax.random.uniform(keys[2 * NUM_LAYERS], (1, HIDDEN_SIZE), jnp.float32,
                               -bound_h, bound_h)                  # (1, 10) (out, in)
    b_out = jax.random.uniform(keys[2 * NUM_LAYERS + 1], (1, 1), jnp.float32,
                               -bound_h, bound_h)
    return w0, b0, w_hidden, b_hidden, w_out, b_out


def reference_forward(x, w0, b0, w_hidden, b_hidden, w_out, b_out):
    """Pure-JAX reference identical to the PyTorch forward (y = x @ W.T + b)."""
    h = jax.nn.sigmoid(x.astype(jnp.float32) @ w0.T + b0[:, 0][None, :])
    for l in range(NUM_LAYERS - 1):
        h = jax.nn.sigmoid(h @ w_hidden[l].T + b_hidden[:, l][None, :])
    return h @ w_out.T + b_out


if __name__ == "__main__":
    key = jax.random.PRNGKey(0)
    pkey, xkey = jax.random.split(key)
    params = init_params(pkey)

    # Small batched input consistent with the module (input_size = 1).
    x = jax.random.normal(xkey, (BATCH, INPUT_SIZE), dtype=jnp.float32)

    out = jax.block_until_ready(net_forward(x, *params))
    ref = reference_forward(x, *params)

    assert out.shape == (BATCH, 1), out.shape
    assert jnp.allclose(out, ref, atol=1e-5, rtol=1e-5), (out, ref)

    print("KERNEL_OK")
</pallas_src>

<mosaic_0001>
module attributes {stable_mosaic.version = 11 : i64} {
  func.func @mlp_kernel(%arg0: i32, %arg1: memref<1x128xf32, #tpu.memory_space<vmem>>, %arg2: memref<10x1xf32, #tpu.memory_space<vmem>>, %arg3: memref<10x1xf32, #tpu.memory_space<vmem>>, %arg4: memref<9x10x10xf32, #tpu.memory_space<vmem>>, %arg5: memref<10x9xf32, #tpu.memory_space<vmem>>, %arg6: memref<10x1xf32, #tpu.memory_space<vmem>>, %arg7: memref<1x1xf32, #tpu.memory_space<vmem>>, %arg8: memref<1x128xf32, #tpu.memory_space<vmem>>) attributes {dimension_semantics = [#tpu.dimension_semantics<parallel>], iteration_bounds = array<i64: 1>, scalar_prefetch = 0 : i64, scratch_operands = 0 : i64, tpu.core_type = #tpu.core_type<tc>, window_params = [{transform_indices = @transform_0, window_bounds = array<i64: 1, 128>}, {pipeline_mode = #tpu.pipeline_mode<synchronous>, transform_indices = @transform_1, window_bounds = array<i64: 10, 1>}, {pipeline_mode = #tpu.pipeline_mode<synchronous>, transform_indices = @transform_2, window_bounds = array<i64: 10, 1>}, {pipeline_mode = #tpu.pipeline_mode<synchronous>, transform_indices = @transform_3, window_bounds = array<i64: 9, 10, 10>}, {pipeline_mode = #tpu.pipeline_mode<synchronous>, transform_indices = @transform_4, window_bounds = array<i64: 10, 9>}, {pipeline_mode = #tpu.pipeline_mode<synchronous>, transform_indices = @transform_5, window_bounds = array<i64: 10, 1>}, {pipeline_mode = #tpu.pipeline_mode<synchronous>, transform_indices = @transform_6, window_bounds = array<i64: 1, 1>}, {transform_indices = @transform_7, window_bounds = array<i64: 1, 128>}]} {
    %c0 = arith.constant 0 : index
    %c0_0 = arith.constant 0 : index
    %0 = vector.load %arg2[%c0, %c0_0] : memref<10x1xf32, #tpu.memory_space<vmem>>, vector<10x1xf32>
    %c0_1 = arith.constant 0 : index
    %c0_2 = arith.constant 0 : index
    %1 = vector.load %arg1[%c0_1, %c0_2] : memref<1x128xf32, #tpu.memory_space<vmem>>, vector<1x128xf32>
    %2 = vector.broadcast %0 : vector<10x1xf32> to vector<10x128xf32>
    %3 = vector.broadcast %1 : vector<1x128xf32> to vector<10x128xf32>
    %4 = arith.mulf %2, %3 : vector<10x128xf32>
    %c0_3 = arith.constant 0 : index
    %c0_4 = arith.constant 0 : index
    %5 = vector.load %arg3[%c0_3, %c0_4] : memref<10x1xf32, #tpu.memory_space<vmem>>, vector<10x1xf32>
    %6 = vector.broadcast %5 : vector<10x1xf32> to vector<10x128xf32>
    %7 = arith.addf %4, %6 : vector<10x128xf32>
    %cst = arith.constant 5.000000e-01 : f32
    %8 = vector.broadcast %cst : f32 to vector<10x128xf32>
    %9 = arith.mulf %7, %8 : vector<10x128xf32>
    %10 = math.tanh %9 : vector<10x128xf32>
    %cst_5 = arith.constant 5.000000e-01 : f32
    %11 = vector.broadcast %cst_5 : f32 to vector<10x128xf32>
    %12 = arith.mulf %10, %11 : vector<10x128xf32>
    %cst_6 = arith.constant 5.000000e-01 : f32
    %13 = vector.broadcast %cst_6 : f32 to vector<10x128xf32>
    %14 = arith.addf %12, %13 : vector<10x128xf32>
    %c0_7 = arith.constant 0 : index
    %c0_8 = arith.constant 0 : index
    %c0_9 = arith.constant 0 : index
    %15 = vector.load %arg4[%c0_7, %c0_8, %c0_9] : memref<9x10x10xf32, #tpu.memory_space<vmem>>, vector<1x10x10xf32>
    %16 = vector.shape_cast %15 : vector<1x10x10xf32> to vector<10x10xf32>
    %17 = vector.extract_strided_slice %16 {offsets = [0, 0], sizes = [10, 1], strides = [1, 1]} : vector<10x10xf32> to vector<10x1xf32>
    %18 = vector.extract_strided_slice %14 {offsets = [0, 0], sizes = [1, 128], strides = [1, 1]} : vector<10x128xf32> to vector<1x128xf32>
    %19 = vector.broadcast %17 : vector<10x1xf32> to vector<10x128xf32>
    %20 = vector.broadcast %18 : vector<1x128xf32> to vector<10x128xf32>
    %21 = arith.mulf %19, %20 : vector<10x128xf32>
    %22 = vector.extract_strided_slice %16 {offsets = [0, 1], sizes = [10, 1], strides = [1, 1]} : vector<10x10xf32> to vector<10x1xf32>
    %23 = vector.extract_strided_slice %14 {offsets = [1, 0], sizes = [1, 128], strides = [1, 1]} : vector<10x128xf32> to vector<1x128xf32>
    %24 = vector.broadcast %22 : vector<10x1xf32> to vector<10x128xf32>
    %25 = vector.broadcast %23 : vector<1x128xf32> to vector<10x128xf32>
    %26 = arith.mulf %24, %25 : vector<10x128xf32>
    %27 = vector.extract_strided_slice %16 {offsets = [0, 2], sizes = [10, 1], strides = [1, 1]} : vector<10x10xf32> to vector<10x1xf32>
    %28 = vector.extract_strided_slice %14 {offsets = [2, 0], sizes = [1, 128], strides = [1, 1]} : vector<10x128xf32> to vector<1x128xf32>
    %29 = vector.broadcast %27 : vector<10x1xf32> to vector<10x128xf32>
    %30 = vector.broadcast %28 : vector<1x128xf32> to vector<10x128xf32>
    %31 = arith.mulf %29, %30 : vector<10x128xf32>
    %32 = vector.extract_strided_slice %16 {offsets = [0, 3], sizes = [10, 1], strides = [1, 1]} : vector<10x10xf32> to vector<10x1xf32>
    %33 = vector.extract_strided_slice %14 {offsets = [3, 0], sizes = [1, 128], strides = [1, 1]} : vector<10x128xf32> to vector<1x128xf32>
    %34 = vector.broadcast %32 : vector<10x1xf32> to vector<10x128xf32>
    %35 = vector.broadcast %33 : vector<1x128xf32> to vector<10x128xf32>
    %36 = arith.mulf %34, %35 : vector<10x128xf32>
    %37 = vector.extract_strided_slice %16 {offsets = [0, 4], sizes = [10, 1], strides = [1, 1]} : vector<10x10xf32> to vector<10x1xf32>
    %38 = vector.extract_strided_slice %14 {offsets = [4, 0], sizes = [1, 128], strides = [1, 1]} : vector<10x128xf32> to vector<1x128xf32>
    %39 = vector.broadcast %37 : vector<10x1xf32> to vector<10x128xf32>
    %40 = vector.broadcast %38 : vector<1x128xf32> to vector<10x128xf32>
    %41 = arith.mulf %39, %40 : vector<10x128xf32>
    %42 = vector.extract_strided_slice %16 {offsets = [0, 5], sizes = [10, 1], strides = [1, 1]} : vector<10x10xf32> to vector<10x1xf32>
    %43 = vector.extract_strided_slice %14 {offsets = [5, 0], sizes = [1, 128], strides = [1, 1]} : vector<10x128xf32> to vector<1x128xf32>
    %44 = vector.broadcast %42 : vector<10x1xf32> to vector<10x128xf32>
    %45 = vector.broadcast %43 : vector<1x128xf32> to vector<10x128xf32>
    %46 = arith.mulf %44, %45 : vector<10x128xf32>
    %47 = vector.extract_strided_slice %16 {offsets = [0, 6], sizes = [10, 1], strides = [1, 1]} : vector<10x10xf32> to vector<10x1xf32>
    %48 = vector.extract_strided_slice %14 {offsets = [6, 0], sizes = [1, 128], strides = [1, 1]} : vector<10x128xf32> to vector<1x128xf32>
    %49 = vector.broadcast %47 : vector<10x1xf32> to vector<10x128xf32>
    %50 = vector.broadcast %48 : vector<1x128xf32> to vector<10x128xf32>
    %51 = arith.mulf %49, %50 : vector<10x128xf32>
    %52 = vector.extract_strided_slice %16 {offsets = [0, 7], sizes = [10, 1], strides = [1, 1]} : vector<10x10xf32> to vector<10x1xf32>
    %53 = vector.extract_strided_slice %14 {offsets = [7, 0], sizes = [1, 128], strides = [1, 1]} : vector<10x128xf32> to vector<1x128xf32>
    %54 = vector.broadcast %52 : vector<10x1xf32> to vector<10x128xf32>
    %55 = vector.broadcast %53 : vector<1x128xf32> to vector<10x128xf32>
    %56 = arith.mulf %54, %55 : vector<10x128xf32>
    %57 = vector.extract_strided_slice %16 {offsets = [0, 8], sizes = [10, 1], strides = [1, 1]} : vector<10x10xf32> to vector<10x1xf32>
    %58 = vector.extract_strided_slice %14 {offsets = [8, 0], sizes = [1, 128], strides = [1, 1]} : vector<10x128xf32> to vector<1x128xf32>
    %59 = vector.broadcast %57 : vector<10x1xf32> to vector<10x128xf32>
    %60 = vector.broadcast %58 : vector<1x128xf32> to vector<10x128xf32>
    %61 = arith.mulf %59, %60 : vector<10x128xf32>
    %62 = vector.extract_strided_slice %16 {offsets = [0, 9], sizes = [10, 1], strides = [1, 1]} : vector<10x10xf32> to vector<10x1xf32>
    %63 = vector.extract_strided_slice %14 {offsets = [9, 0], sizes = [1, 128], strides = [1, 1]} : vector<10x128xf32> to vector<1x128xf32>
    %64 = vector.broadcast %62 : vector<10x1xf32> to vector<10x128xf32>
    %65 = vector.broadcast %63 : vector<1x128xf32> to vector<10x128xf32>
    %66 = arith.mulf %64, %65 : vector<10x128xf32>
    %67 = arith.addf %21, %26 : vector<10x128xf32>
    %68 = arith.addf %31, %36 : vector<10x128xf32>
    %69 = arith.addf %41, %46 : vector<10x128xf32>
    %70 = arith.addf %51, %56 : vector<10x128xf32>
    %71 = arith.addf %61, %66 : vector<10x128xf32>
    %72 = arith.addf %67, %68 : vector<10x128xf32>
    %73 = arith.addf %69, %70 : vector<10x128xf32>
    %74 = arith.addf %72, %73 : vector<10x128xf32>
    %75 = arith.addf %74, %71 : vector<10x128xf32>
    %c0_10 = arith.constant 0 : index
    %c0_11 = arith.constant 0 : index
    %76 = vector.load %arg5[%c0_10, %c0_11] : memref<10x9xf32, #tpu.memory_space<vmem>>, vector<10x1xf32>
    %77 = vector.broadcast %76 : vector<10x1xf32> to vector<10x128xf32>
    %78 = arith.addf %75, %77 : vector<10x128xf32>
    %cst_12 = arith.constant 5.000000e-01 : f32
    %79 = vector.broadcast %cst_12 : f32 to vector<10x128xf32>
    %80 = arith.mulf %78, %79 : vector<10x128xf32>
    %81 = math.tanh %80 : vector<10x128xf32>
    %cst_13 = arith.constant 5.000000e-01 : f32
    %82 = vector.broadcast %cst_13 : f32 to vector<10x128xf32>
    %83 = arith.mulf %81, %82 : vector<10x128xf32>
    %cst_14 = arith.constant 5.000000e-01 : f32
    %84 = vector.broadcast %cst_14 : f32 to vector<10x128xf32>
    %85 = arith.addf %83, %84 : vector<10x128xf32>
    %c1 = arith.constant 1 : index
    %c0_15 = arith.constant 0 : index
    %c0_16 = arith.constant 0 : index
    %86 = vector.load %arg4[%c1, %c0_15, %c0_16] : memref<9x10x10xf32, #tpu.memory_space<vmem>>, vector<1x10x10xf32>
    %87 = vector.shape_cast %86 : vector<1x10x10xf32> to vector<10x10xf32>
    %88 = vector.extract_strided_slice %87 {offsets = [0, 0], sizes = [10, 1], strides = [1, 1]} : vector<10x10xf32> to vector<10x1xf32>
    %89 = vector.extract_strided_slice %85 {offsets = [0, 0], sizes = [1, 128], strides = [1, 1]} : vector<10x128xf32> to vector<1x128xf32>
    %90 = vector.broadcast %88 : vector<10x1xf32> to vector<10x128xf32>
    %91 = vector.broadcast %89 : vector<1x128xf32> to vector<10x128xf32>
    %92 = arith.mulf %90, %91 : vector<10x128xf32>
    %93 = vector.extract_strided_slice %87 {offsets = [0, 1], sizes = [10, 1], strides = [1, 1]} : vector<10x10xf32> to vector<10x1xf32>
    %94 = vector.extract_strided_slice %85 {offsets = [1, 0], sizes = [1, 128], strides = [1, 1]} : vector<10x128xf32> to vector<1x128xf32>
    %95 = vector.broadcast %93 : vector<10x1xf32> to vector<10x128xf32>
    %96 = vector.broadcast %94 : vector<1x128xf32> to vector<10x128xf32>
    %97 = arith.mulf %95, %96 : vector<10x128xf32>
    %98 = vector.extract_strided_slice %87 {offsets = [0, 2], sizes = [10, 1], strides = [1, 1]} : vector<10x10xf32> to vector<10x1xf32>
    %99 = vector.extract_strided_slice %85 {offsets = [2, 0], sizes = [1, 128], strides = [1, 1]} : vector<10x128xf32> to vector<1x128xf32>
    %100 = vector.broadcast %98 : vector<10x1xf32> to vector<10x128xf32>
    %101 = vector.broadcast %99 : vector<1x128xf32> to vector<10x128xf32>
    %102 = arith.mulf %100, %101 : vector<10x128xf32>
    %103 = vector.extract_strided_slice %87 {offsets = [0, 3], sizes = [10, 1], strides = [1, 1]} : vector<10x10xf32> to vector<10x1xf32>
    %104 = vector.extract_strided_slice %85 {offsets = [3, 0], sizes = [1, 128], strides = [1, 1]} : vector<10x128xf32> to vector<1x128xf32>
    %105 = vector.broadcast %103 : vector<10x1xf32> to vector<10x128xf32>
    %106 = vector.broadcast %104 : vector<1x128xf32> to vector<10x128xf32>
    %107 = arith.mulf %105, %106 : vector<10x128xf32>
    %108 = vector.extract_strided_slice %87 {offsets = [0, 4], sizes = [10, 1], strides = [1, 1]} : vector<10x10xf32> to vector<10x1xf32>
    %109 = vector.extract_strided_slice %85 {offsets = [4, 0], sizes = [1, 128], strides = [1, 1]} : vector<10x128xf32> to vector<1x128xf32>
    %110 = vector.broadcast %108 : vector<10x1xf32> to vector<10x128xf32>
    %111 = vector.broadcast %109 : vector<1x128xf32> to vector<10x128xf32>
    %112 = arith.mulf %110, %111 : vector<10x128xf32>
    %113 = vector.extract_strided_slice %87 {offsets = [0, 5], sizes = [10, 1], strides = [1, 1]} : vector<10x10xf32> to vector<10x1xf32>
    %114 = vector.extract_strided_slice %85 {offsets = [5, 0], sizes = [1, 128], strides = [1, 1]} : vector<10x128xf32> to vector<1x128xf32>
    %115 = vector.broadcast %113 : vector<10x1xf32> to vector<10x128xf32>
    %116 = vector.broadcast %114 : vector<1x128xf32> to vector<10x128xf32>
    %117 = arith.mulf %115, %116 : vector<10x128xf32>
    %118 = vector.extract_strided_slice %87 {offsets = [0, 6], sizes = [10, 1], strides = [1, 1]} : vector<10x10xf32> to vector<10x1xf32>
    %119 = vector.extract_strided_slice %85 {offsets = [6, 0], sizes = [1, 128], strides = [1, 1]} : vector<10x128xf32> to vector<1x128xf32>
    %120 = vector.broadcast %118 : vector<10x1xf32> to vector<10x128xf32>
    %121 = vector.broadcast %119 : vector<1x128xf32> to vector<10x128xf32>
    %122 = arith.mulf %120, %121 : vector<10x128xf32>
    %123 = vector.extract_strided_slice %87 {offsets = [0, 7], sizes = [10, 1], strides = [1, 1]} : vector<10x10xf32> to vector<10x1xf32>
    %124 = vector.extract_strided_slice %85 {offsets = [7, 0], sizes = [1, 128], strides = [1, 1]} : vector<10x128xf32> to vector<1x128xf32>
    %125 = vector.broadcast %123 : vector<10x1xf32> to vector<10x128xf32>
    %126 = vector.broadcast %124 : vector<1x128xf32> to vector<10x128xf32>
    %127 = arith.mulf %125, %126 : vector<10x128xf32>
    %128 = vector.extract_strided_slice %87 {offsets = [0, 8], sizes = [10, 1], strides = [1, 1]} : vector<10x10xf32> to vector<10x1xf32>
    %129 = vector.extract_strided_slice %85 {offsets = [8, 0], sizes = [1, 128], strides = [1, 1]} : vector<10x128xf32> to vector<1x128xf32>
    %130 = vector.broadcast %128 : vector<10x1xf32> to vector<10x128xf32>
    %131 = vector.broadcast %129 : vector<1x128xf32> to vector<10x128xf32>
    %132 = arith.mulf %130, %131 : vector<10x128xf32>
    %133 = vector.extract_strided_slice %87 {offsets = [0, 9], sizes = [10, 1], strides = [1, 1]} : vector<10x10xf32> to vector<10x1xf32>
    %134 = vector.extract_strided_slice %85 {offsets = [9, 0], sizes = [1, 128], strides = [1, 1]} : vector<10x128xf32> to vector<1x128xf32>
    %135 = vector.broadcast %133 : vector<10x1xf32> to vector<10x128xf32>
    %136 = vector.broadcast %134 : vector<1x128xf32> to vector<10x128xf32>
    %137 = arith.mulf %135, %136 : vector<10x128xf32>
    %138 = arith.addf %92, %97 : vector<10x128xf32>
    %139 = arith.addf %102, %107 : vector<10x128xf32>
    %140 = arith.addf %112, %117 : vector<10x128xf32>
    %141 = arith.addf %122, %127 : vector<10x128xf32>
    %142 = arith.addf %132, %137 : vector<10x128xf32>
    %143 = arith.addf %138, %139 : vector<10x128xf32>
    %144 = arith.addf %140, %141 : vector<10x128xf32>
    %145 = arith.addf %143, %144 : vector<10x128xf32>
    %146 = arith.addf %145, %142 : vector<10x128xf32>
    %c0_17 = arith.constant 0 : index
    %c1_18 = arith.constant 1 : index
    %147 = vector.load %arg5[%c0_17, %c1_18] : memref<10x9xf32, #tpu.memory_space<vmem>>, vector<10x1xf32>
    %148 = vector.broadcast %147 : vector<10x1xf32> to vector<10x128xf32>
    %149 = arith.addf %146, %148 : vector<10x128xf32>
    %cst_19 = arith.constant 5.000000e-01 : f32
    %150 = vector.broadcast %cst_19 : f32 to vector<10x128xf32>
    %151 = arith.mulf %149, %150 : vector<10x128xf32>
    %152 = math.tanh %151 : vector<10x128xf32>
    %cst_20 = arith.constant 5.000000e-01 : f32
    %153 = vector.broadcast %cst_20 : f32 to vector<10x128xf32>
    %154 = arith.mulf %152, %153 : vector<10x128xf32>
    %cst_21 = arith.constant 5.000000e-01 : f32
    %155 = vector.broadcast %cst_21 : f32 to vector<10x128xf32>
    %156 = arith.addf %154, %155 : vector<10x128xf32>
    %c2 = arith.constant 2 : index
    %c0_22 = arith.constant 0 : index
    %c0_23 = arith.constant 0 : index
    %157 = vector.load %arg4[%c2, %c0_22, %c0_23] : memref<9x10x10xf32, #tpu.memory_space<vmem>>, vector<1x10x10xf32>
    %158 = vector.shape_cast %157 : vector<1x10x10xf32> to vector<10x10xf32>
    %159 = vector.extract_strided_slice %158 {offsets = [0, 0], sizes = [10, 1], strides = [1, 1]} : vector<10x10xf32> to vector<10x1xf32>
    %160 = vector.extract_strided_slice %156 {offsets = [0, 0], sizes = [1, 128], strides = [1, 1]} : vector<10x128xf32> to vector<1x128xf32>
    %161 = vector.broadcast %159 : vector<10x1xf32> to vector<10x128xf32>
    %162 = vector.broadcast %160 : vector<1x128xf32> to vector<10x128xf32>
    %163 = arith.mulf %161, %162 : vector<10x128xf32>
    %164 = vector.extract_strided_slice %158 {offsets = [0, 1], sizes = [10, 1], strides = [1, 1]} : vector<10x10xf32> to vector<10x1xf32>
    %165 = vector.extract_strided_slice %156 {offsets = [1, 0], sizes = [1, 128], strides = [1, 1]} : vector<10x128xf32> to vector<1x128xf32>
    %166 = vector.broadcast %164 : vector<10x1xf32> to vector<10x128xf32>
    %167 = vector.broadcast %165 : vector<1x128xf32> to vector<10x128xf32>
    %168 = arith.mulf %166, %167 : vector<10x128xf32>
    %169 = vector.extract_strided_slice %158 {offsets = [0, 2], sizes = [10, 1], strides = [1, 1]} : vector<10x10xf32> to vector<10x1xf32>
    %170 = vector.extract_strided_slice %156 {offsets = [2, 0], sizes = [1, 128], strides = [1, 1]} : vector<10x128xf32> to vector<1x128xf32>
    %171 = vector.broadcast %169 : vector<10x1xf32> to vector<10x128xf32>
    %172 = vector.broadcast %170 : vector<1x128xf32> to vector<10x128xf32>
    %173 = arith.mulf %171, %172 : vector<10x128xf32>
    %174 = vector.extract_strided_slice %158 {offsets = [0, 3], sizes = [10, 1], strides = [1, 1]} : vector<10x10xf32> to vector<10x1xf32>
    %175 = vector.extract_strided_slice %156 {offsets = [3, 0], sizes = [1, 128], strides = [1, 1]} : vector<10x128xf32> to vector<1x128xf32>
    %176 = vector.broadcast %174 : vector<10x1xf32> to vector<10x128xf32>
    %177 = vector.broadcast %175 : vector<1x128xf32> to vector<10x128xf32>
    %178 = arith.mulf %176, %177 : vector<10x128xf32>
    %179 = vector.extract_strided_slice %158 {offsets = [0, 4], sizes = [10, 1], strides = [1, 1]} : vector<10x10xf32> to vector<10x1xf32>
    %180 = vector.extract_strided_slice %156 {offsets = [4, 0], sizes = [1, 128], strides = [1, 1]} : vector<10x128xf32> to vector<1x128xf32>
    %181 = vector.broadcast %179 : vector<10x1xf32> to vector<10x128xf32>
    %182 = vector.broadcast %180 : vector<1x128xf32> to vector<10x128xf32>
    %183 = arith.mulf %181, %182 : vector<10x128xf32>
    %184 = vector.extract_strided_slice %158 {offsets = [0, 5], sizes = [10, 1], strides = [1, 1]} : vector<10x10xf32> to vector<10x1xf32>
    %185 = vector.extract_strided_slice %156 {offsets = [5, 0], sizes = [1, 128], strides = [1, 1]} : vector<10x128xf32> to vector<1x128xf32>
    %186 = vector.broadcast %184 : vector<10x1xf32> to vector<10x128xf32>
    %187 = vector.broadcast %185 : vector<1x128xf32> to vector<10x128xf32>
    %188 = arith.mulf %186, %187 : vector<10x128xf32>
    %189 = vector.extract_strided_slice %158 {offsets = [0, 6], sizes = [10, 1], strides = [1, 1]} : vector<10x10xf32> to vector<10x1xf32>
    %190 = vector.extract_strided_slice %156 {offsets = [6, 0], sizes = [1, 128], strides = [1, 1]} : vector<10x128xf32> to vector<1x128xf32>
    %191 = vector.broadcast %189 : vector<10x1xf32> to vector<10x128xf32>
    %192 = vector.broadcast %190 : vector<1x128xf32> to vector<10x128xf32>
    %193 = arith.mulf %191, %192 : vector<10x128xf32>
    %194 = vector.extract_strided_slice %158 {offsets = [0, 7], sizes = [10, 1], strides = [1, 1]} : vector<10x10xf32> to vector<10x1xf32>
    %195 = vector.extract_strided_slice %156 {offsets = [7, 0], sizes = [1, 128], strides = [1, 1]} : vector<10x128xf32> to vector<1x128xf32>
    %196 = vector.broadcast %194 : vector<10x1xf32> to vector<10x128xf32>
    %197 = vector.broadcast %195 : vector<1x128xf32> to vector<10x128xf32>
    %198 = arith.mulf %196, %197 : vector<10x128xf32>
    %199 = vector.extract_strided_slice %158 {offsets = [0, 8], sizes = [10, 1], strides = [1, 1]} : vector<10x10xf32> to vector<10x1xf32>
    %200 = vector.extract_strided_slice %156 {offsets = [8, 0], sizes = [1, 128], strides = [1, 1]} : vector<10x128xf32> to vector<1x128xf32>
    %201 = vector.broadcast %199 : vector<10x1xf32> to vector<10x128xf32>
    %202 = vector.broadcast %200 : vector<1x128xf32> to vector<10x128xf32>
    %203 = arith.mulf %201, %202 : vector<10x128xf32>
    %204 = vector.extract_strided_slice %158 {offsets = [0, 9], sizes = [10, 1], strides = [1, 1]} : vector<10x10xf32> to vector<10x1xf32>
    %205 = vector.extract_strided_slice %156 {offsets = [9, 0], sizes = [1, 128], strides = [1, 1]} : vector<10x128xf32> to vector<1x128xf32>
    %206 = vector.broadcast %204 : vector<10x1xf32> to vector<10x128xf32>
    %207 = vector.broadcast %205 : vector<1x128xf32> to vector<10x128xf32>
    %208 = arith.mulf %206, %207 : vector<10x128xf32>
    %209 = arith.addf %163, %168 : vector<10x128xf32>
    %210 = arith.addf %173, %178 : vector<10x128xf32>
    %211 = arith.addf %183, %188 : vector<10x128xf32>
    %212 = arith.addf %193, %198 : vector<10x128xf32>
    %213 = arith.addf %203, %208 : vector<10x128xf32>
    %214 = arith.addf %209, %210 : vector<10x128xf32>
    %215 = arith.addf %211, %212 : vector<10x128xf32>
    %216 = arith.addf %214, %215 : vector<10x128xf32>
    %217 = arith.addf %216, %213 : vector<10x128xf32>
    %c0_24 = arith.constant 0 : index
    %c2_25 = arith.constant 2 : index
    %218 = vector.load %arg5[%c0_24, %c2_25] : memref<10x9xf32, #tpu.memory_space<vmem>>, vector<10x1xf32>
    %219 = vector.broadcast %218 : vector<10x1xf32> to vector<10x128xf32>
    %220 = arith.addf %217, %219 : vector<10x128xf32>
    %cst_26 = arith.constant 5.000000e-01 : f32
    %221 = vector.broadcast %cst_26 : f32 to vector<10x128xf32>
    %222 = arith.mulf %220, %221 : vector<10x128xf32>
    %223 = math.tanh %222 : vector<10x128xf32>
    %cst_27 = arith.constant 5.000000e-01 : f32
    %224 = vector.broadcast %cst_27 : f32 to vector<10x128xf32>
    %225 = arith.mulf %223, %224 : vector<10x128xf32>
    %cst_28 = arith.constant 5.000000e-01 : f32
    %226 = vector.broadcast %cst_28 : f32 to vector<10x128xf32>
    %227 = arith.addf %225, %226 : vector<10x128xf32>
    %c3 = arith.constant 3 : index
    %c0_29 = arith.constant 0 : index
    %c0_30 = arith.constant 0 : index
    %228 = vector.load %arg4[%c3, %c0_29, %c0_30] : memref<9x10x10xf32, #tpu.memory_space<vmem>>, vector<1x10x10xf32>
    %229 = vector.shape_cast %228 : vector<1x10x10xf32> to vector<10x10xf32>
    %230 = vector.extract_strided_slice %229 {offsets = [0, 0], sizes = [10, 1], strides = [1, 1]} : vector<10x10xf32> to vector<10x1xf32>
    %231 = vector.extract_strided_slice %227 {offsets = [0, 0], sizes = [1, 128], strides = [1, 1]} : vector<10x128xf32> to vector<1x128xf32>
    %232 = vector.broadcast %230 : vector<10x1xf32> to vector<10x128xf32>
    %233 = vector.broadcast %231 : vector<1x128xf32> to vector<10x128xf32>
    %234 = arith.mulf %232, %233 : vector<10x128xf32>
    %235 = vector.extract_strided_slice %229 {offsets = [0, 1], sizes = [10, 1], strides = [1, 1]} : vector<10x10xf32> to vector<10x1xf32>
    %236 = vector.extract_strided_slice %227 {offsets = [1, 0], sizes = [1, 128], strides = [1, 1]} : vector<10x128xf32> to vector<1x128xf32>
    %237 = vector.broadcast %235 : vector<10x1xf32> to vector<10x128xf32>
    %238 = vector.broadcast %236 : vector<1x128xf32> to vector<10x128xf32>
    %239 = arith.mulf %237, %238 : vector<10x128xf32>
    %240 = vector.extract_strided_slice %229 {offsets = [0, 2], sizes = [10, 1], strides = [1, 1]} : vector<10x10xf32> to vector<10x1xf32>
    %241 = vector.extract_strided_slice %227 {offsets = [2, 0], sizes = [1, 128], strides = [1, 1]} : vector<10x128xf32> to vector<1x128xf32>
    %242 = vector.broadcast %240 : vector<10x1xf32> to vector<10x128xf32>
    %243 = vector.broadcast %241 : vector<1x128xf32> to vector<10x128xf32>
    %244 = arith.mulf %242, %243 : vector<10x128xf32>
    %245 = vector.extract_strided_slice %229 {offsets = [0, 3], sizes = [10, 1], strides = [1, 1]} : vector<10x10xf32> to vector<10x1xf32>
    %246 = vector.extract_strided_slice %227 {offsets = [3, 0], sizes = [1, 128], strides = [1, 1]} : vector<10x128xf32> to vector<1x128xf32>
    %247 = vector.broadcast %245 : vector<10x1xf32> to vector<10x128xf32>
    %248 = vector.broadcast %246 : vector<1x128xf32> to vector<10x128xf32>
    %249 = arith.mulf %247, %248 : vector<10x128xf32>
    %250 = vector.extract_strided_slice %229 {offsets = [0, 4], sizes = [10, 1], strides = [1, 1]} : vector<10x10xf32> to vector<10x1xf32>
    %251 = vector.extract_strided_slice %227 {offsets = [4, 0], sizes = [1, 128], strides = [1, 1]} : vector<10x128xf32> to vector<1x128xf32>
    %252 = vector.broadcast %250 : vector<10x1xf32> to vector<10x128xf32>
    %253 = vector.broadcast %251 : vector<1x128xf32> to vector<10x128xf32>
    %254 = arith.mulf %252, %253 : vector<10x128xf32>
    %255 = vector.extract_strided_slice %229 {offsets = [0, 5], sizes = [10, 1], strides = [1, 1]} : vector<10x10xf32> to vector<10x1xf32>
    %256 = vector.extract_strided_slice %227 {offsets = [5, 0], sizes = [1, 128], strides = [1, 1]} : vector<10x128xf32> to vector<1x128xf32>
    %257 = vector.broadcast %255 : vector<10x1xf32> to vector<10x128xf32>
    %258 = vector.broadcast %256 : vector<1x128xf32> to vector<10x128xf32>
    %259 = arith.mulf %257, %258 : vector<10x128xf32>
    %260 = vector.extract_strided_slice %229 {offsets = [0, 6], sizes = [10, 1], strides = [1, 1]} : vector<10x10xf32> to vector<10x1xf32>
    %261 = vector.extract_strided_slice %227 {offsets = [6, 0], sizes = [1, 128], strides = [1, 1]} : vector<10x128xf32> to vector<1x128xf32>
    %262 = vector.broadcast %260 : vector<10x1xf32> to vector<10x128xf32>
    %263 = vector.broadcast %261 : vector<1x128xf32> to vector<10x128xf32>
    %264 = arith.mulf %262, %263 : vector<10x128xf32>
    %265 = vector.extract_strided_slice %229 {offsets = [0, 7], sizes = [10, 1], strides = [1, 1]} : vector<10x10xf32> to vector<10x1xf32>
    %266 = vector.extract_strided_slice %227 {offsets = [7, 0], sizes = [1, 128], strides = [1, 1]} : vector<10x128xf32> to vector<1x128xf32>
    %267 = vector.broadcast %265 : vector<10x1xf32> to vector<10x128xf32>
    %268 = vector.broadcast %266 : vector<1x128xf32> to vector<10x128xf32>
    %269 = arith.mulf %267, %268 : vector<10x128xf32>
    %270 = vector.extract_strided_slice %229 {offsets = [0, 8], sizes = [10, 1], strides = [1, 1]} : vector<10x10xf32> to vector<10x1xf32>
    %271 = vector.extract_strided_slice %227 {offsets = [8, 0], sizes = [1, 128], strides = [1, 1]} : vector<10x128xf32> to vector<1x128xf32>
    %272 = vector.broadcast %270 : vector<10x1xf32> to vector<10x128xf32>
    %273 = vector.broadcast %271 : vector<1x128xf32> to vector<10x128xf32>
    %274 = arith.mulf %272, %273 : vector<10x128xf32>
    %275 = vector.extract_strided_slice %229 {offsets = [0, 9], sizes = [10, 1], strides = [1, 1]} : vector<10x10xf32> to vector<10x1xf32>
    %276 = vector.extract_strided_slice %227 {offsets = [9, 0], sizes = [1, 128], strides = [1, 1]} : vector<10x128xf32> to vector<1x128xf32>
    %277 = vector.broadcast %275 : vector<10x1xf32> to vector<10x128xf32>
    %278 = vector.broadcast %276 : vector<1x128xf32> to vector<10x128xf32>
    %279 = arith.mulf %277, %278 : vector<10x128xf32>
    %280 = arith.addf %234, %239 : vector<10x128xf32>
    %281 = arith.addf %244, %249 : vector<10x128xf32>
    %282 = arith.addf %254, %259 : vector<10x128xf32>
    %283 = arith.addf %264, %269 : vector<10x128xf32>
    %284 = arith.addf %274, %279 : vector<10x128xf32>
    %285 = arith.addf %280, %281 : vector<10x128xf32>
    %286 = arith.addf %282, %283 : vector<10x128xf32>
    %287 = arith.addf %285, %286 : vector<10x128xf32>
    %288 = arith.addf %287, %284 : vector<10x128xf32>
    %c0_31 = arith.constant 0 : index
    %c3_32 = arith.constant 3 : index
    %289 = vector.load %arg5[%c0_31, %c3_32] : memref<10x9xf32, #tpu.memory_space<vmem>>, vector<10x1xf32>
    %290 = vector.broadcast %289 : vector<10x1xf32> to vector<10x128xf32>
    %291 = arith.addf %288, %290 : vector<10x128xf32>
    %cst_33 = arith.constant 5.000000e-01 : f32
    %292 = vector.broadcast %cst_33 : f32 to vector<10x128xf32>
    %293 = arith.mulf %291, %292 : vector<10x128xf32>
    %294 = math.tanh %293 : vector<10x128xf32>
    %cst_34 = arith.constant 5.000000e-01 : f32
    %295 = vector.broadcast %cst_34 : f32 to vector<10x128xf32>
    %296 = arith.mulf %294, %295 : vector<10x128xf32>
    %cst_35 = arith.constant 5.000000e-01 : f32
    %297 = vector.broadcast %cst_35 : f32 to vector<10x128xf32>
    %298 = arith.addf %296, %297 : vector<10x128xf32>
    %c4 = arith.constant 4 : index
    %c0_36 = arith.constant 0 : index
    %c0_37 = arith.constant 0 : index
    %299 = vector.load %arg4[%c4, %c0_36, %c0_37] : memref<9x10x10xf32, #tpu.memory_space<vmem>>, vector<1x10x10xf32>
    %300 = vector.shape_cast %299 : vector<1x10x10xf32> to vector<10x10xf32>
    %301 = vector.extract_strided_slice %300 {offsets = [0, 0], sizes = [10, 1], strides = [1, 1]} : vector<10x10xf32> to vector<10x1xf32>
    %302 = vector.extract_strided_slice %298 {offsets = [0, 0], sizes = [1, 128], strides = [1, 1]} : vector<10x128xf32> to vector<1x128xf32>
    %303 = vector.broadcast %301 : vector<10x1xf32> to vector<10x128xf32>
    %304 = vector.broadcast %302 : vector<1x128xf32> to vector<10x128xf32>
    %305 = arith.mulf %303, %304 : vector<10x128xf32>
    %306 = vector.extract_strided_slice %300 {offsets = [0, 1], sizes = [10, 1], strides = [1, 1]} : vector<10x10xf32> to vector<10x1xf32>
    %307 = vector.extract_strided_slice %298 {offsets = [1, 0], sizes = [1, 128], strides = [1, 1]} : vector<10x128xf32> to vector<1x128xf32>
    %308 = vector.broadcast %306 : vector<10x1xf32> to vector<10x128xf32>
    %309 = vector.broadcast %307 : vector<1x128xf32> to vector<10x128xf32>
    %310 = arith.mulf %308, %309 : vector<10x128xf32>
    %311 = vector.extract_strided_slice %300 {offsets = [0, 2], sizes = [10, 1], strides = [1, 1]} : vector<10x10xf32> to vector<10x1xf32>
    %312 = vector.extract_strided_slice %298 {offsets = [2, 0], sizes = [1, 128], strides = [1, 1]} : vector<10x128xf32> to vector<1x128xf32>
    %313 = vector.broadcast %311 : vector<10x1xf32> to vector<10x128xf32>
    %314 = vector.broadcast %312 : vector<1x128xf32> to vector<10x128xf32>
    %315 = arith.mulf %313, %314 : vector<10x128xf32>
    %316 = vector.extract_strided_slice %300 {offsets = [0, 3], sizes = [10, 1], strides = [1, 1]} : vector<10x10xf32> to vector<10x1xf32>
    %317 = vector.extract_strided_slice %298 {offsets = [3, 0], sizes = [1, 128], strides = [1, 1]} : vector<10x128xf32> to vector<1x128xf32>
    %318 = vector.broadcast %316 : vector<10x1xf32> to vector<10x128xf32>
    %319 = vector.broadcast %317 : vector<1x128xf32> to vector<10x128xf32>
    %320 = arith.mulf %318, %319 : vector<10x128xf32>
    %321 = vector.extract_strided_slice %300 {offsets = [0, 4], sizes = [10, 1], strides = [1, 1]} : vector<10x10xf32> to vector<10x1xf32>
    %322 = vector.extract_strided_slice %298 {offsets = [4, 0], sizes = [1, 128], strides = [1, 1]} : vector<10x128xf32> to vector<1x128xf32>
    %323 = vector.broadcast %321 : vector<10x1xf32> to vector<10x128xf32>
    %324 = vector.broadcast %322 : vector<1x128xf32> to vector<10x128xf32>
    %325 = arith.mulf %323, %324 : vector<10x128xf32>
    %326 = vector.extract_strided_slice %300 {offsets = [0, 5], sizes = [10, 1], strides = [1, 1]} : vector<10x10xf32> to vector<10x1xf32>
    %327 = vector.extract_strided_slice %298 {offsets = [5, 0], sizes = [1, 128], strides = [1, 1]} : vector<10x128xf32> to vector<1x128xf32>
    %328 = vector.broadcast %326 : vector<10x1xf32> to vector<10x128xf32>
    %329 = vector.broadcast %327 : vector<1x128xf32> to vector<10x128xf32>
    %330 = arith.mulf %328, %329 : vector<10x128xf32>
    %331 = vector.extract_strided_slice %300 {offsets = [0, 6], sizes = [10, 1], strides = [1, 1]} : vector<10x10xf32> to vector<10x1xf32>
    %332 = vector.extract_strided_slice %298 {offsets = [6, 0], sizes = [1, 128], strides = [1, 1]} : vector<10x128xf32> to vector<1x128xf32>
    %333 = vector.broadcast %331 : vector<10x1xf32> to vector<10x128xf32>
    %334 = vector.broadcast %332 : vector<1x128xf32> to vector<10x128xf32>
    %335 = arith.mulf %333, %334 : vector<10x128xf32>
    %336 = vector.extract_strided_slice %300 {offsets = [0, 7], sizes = [10, 1], strides = [1, 1]} : vector<10x10xf32> to vector<10x1xf32>
    %337 = vector.extract_strided_slice %298 {offsets = [7, 0], sizes = [1, 128], strides = [1, 1]} : vector<10x128xf32> to vector<1x128xf32>
    %338 = vector.broadcast %336 : vector<10x1xf32> to vector<10x128xf32>
    %339 = vector.broadcast %337 : vector<1x128xf32> to vector<10x128xf32>
    %340 = arith.mulf %338, %339 : vector<10x128xf32>
    %341 = vector.extract_strided_slice %300 {offsets = [0, 8], sizes = [10, 1], strides = [1, 1]} : vector<10x10xf32> to vector<10x1xf32>
    %342 = vector.extract_strided_slice %298 {offsets = [8, 0], sizes = [1, 128], strides = [1, 1]} : vector<10x128xf32> to vector<1x128xf32>
    %343 = vector.broadcast %341 : vector<10x1xf32> to vector<10x128xf32>
    %344 = vector.broadcast %342 : vector<1x128xf32> to vector<10x128xf32>
    %345 = arith.mulf %343, %344 : vector<10x128xf32>
    %346 = vector.extract_strided_slice %300 {offsets = [0, 9], sizes = [10, 1], strides = [1, 1]} : vector<10x10xf32> to vector<10x1xf32>
    %347 = vector.extract_strided_slice %298 {offsets = [9, 0], sizes = [1, 128], strides = [1, 1]} : vector<10x128xf32> to vector<1x128xf32>
    %348 = vector.broadcast %346 : vector<10x1xf32> to vector<10x128xf32>
    %349 = vector.broadcast %347 : vector<1x128xf32> to vector<10x128xf32>
    %350 = arith.mulf %348, %349 : vector<10x128xf32>
    %351 = arith.addf %305, %310 : vector<10x128xf32>
    %352 = arith.addf %315, %320 : vector<10x128xf32>
    %353 = arith.addf %325, %330 : vector<10x128xf32>
    %354 = arith.addf %335, %340 : vector<10x128xf32>
    %355 = arith.addf %345, %350 : vector<10x128xf32>
    %356 = arith.addf %351, %352 : vector<10x128xf32>
    %357 = arith.addf %353, %354 : vector<10x128xf32>
    %358 = arith.addf %356, %357 : vector<10x128xf32>
    %359 = arith.addf %358, %355 : vector<10x128xf32>
    %c0_38 = arith.constant 0 : index
    %c4_39 = arith.constant 4 : index
    %360 = vector.load %arg5[%c0_38, %c4_39] : memref<10x9xf32, #tpu.memory_space<vmem>>, vector<10x1xf32>
    %361 = vector.broadcast %360 : vector<10x1xf32> to vector<10x128xf32>
    %362 = arith.addf %359, %361 : vector<10x128xf32>
    %cst_40 = arith.constant 5.000000e-01 : f32
    %363 = vector.broadcast %cst_40 : f32 to vector<10x128xf32>
    %364 = arith.mulf %362, %363 : vector<10x128xf32>
    %365 = math.tanh %364 : vector<10x128xf32>
    %cst_41 = arith.constant 5.000000e-01 : f32
    %366 = vector.broadcast %cst_41 : f32 to vector<10x128xf32>
    %367 = arith.mulf %365, %366 : vector<10x128xf32>
    %cst_42 = arith.constant 5.000000e-01 : f32
    %368 = vector.broadcast %cst_42 : f32 to vector<10x128xf32>
    %369 = arith.addf %367, %368 : vector<10x128xf32>
    %c5 = arith.constant 5 : index
    %c0_43 = arith.constant 0 : index
    %c0_44 = arith.constant 0 : index
    %370 = vector.load %arg4[%c5, %c0_43, %c0_44] : memref<9x10x10xf32, #tpu.memory_space<vmem>>, vector<1x10x10xf32>
    %371 = vector.shape_cast %370 : vector<1x10x10xf32> to vector<10x10xf32>
    %372 = vector.extract_strided_slice %371 {offsets = [0, 0], sizes = [10, 1], strides = [1, 1]} : vector<10x10xf32> to vector<10x1xf32>
    %373 = vector.extract_strided_slice %369 {offsets = [0, 0], sizes = [1, 128], strides = [1, 1]} : vector<10x128xf32> to vector<1x128xf32>
    %374 = vector.broadcast %372 : vector<10x1xf32> to vector<10x128xf32>
    %375 = vector.broadcast %373 : vector<1x128xf32> to vector<10x128xf32>
    %376 = arith.mulf %374, %375 : vector<10x128xf32>
    %377 = vector.extract_strided_slice %371 {offsets = [0, 1], sizes = [10, 1], strides = [1, 1]} : vector<10x10xf32> to vector<10x1xf32>
    %378 = vector.extract_strided_slice %369 {offsets = [1, 0], sizes = [1, 128], strides = [1, 1]} : vector<10x128xf32> to vector<1x128xf32>
    %379 = vector.broadcast %377 : vector<10x1xf32> to vector<10x128xf32>
    %380 = vector.broadcast %378 : vector<1x128xf32> to vector<10x128xf32>
    %381 = arith.mulf %379, %380 : vector<10x128xf32>
    %382 = vector.extract_strided_slice %371 {offsets = [0, 2], sizes = [10, 1], strides = [1, 1]} : vector<10x10xf32> to vector<10x1xf32>
    %383 = vector.extract_strided_slice %369 {offsets = [2, 0], sizes = [1, 128], strides = [1, 1]} : vector<10x128xf32> to vector<1x128xf32>
    %384 = vector.broadcast %382 : vector<10x1xf32> to vector<10x128xf32>
    %385 = vector.broadcast %383 : vector<1x128xf32> to vector<10x128xf32>
    %386 = arith.mulf %384, %385 : vector<10x128xf32>
    %387 = vector.extract_strided_slice %371 {offsets = [0, 3], sizes = [10, 1], strides = [1, 1]} : vector<10x10xf32> to vector<10x1xf32>
    %388 = vector.extract_strided_slice %369 {offsets = [3, 0], sizes = [1, 128], strides = [1, 1]} : vector<10x128xf32> to vector<1x128xf32>
    %389 = vector.broadcast %387 : vector<10x1xf32> to vector<10x128xf32>
    %390 = vector.broadcast %388 : vector<1x128xf32> to vector<10x128xf32>
    %391 = arith.mulf %389, %390 : vector<10x128xf32>
    %392 = vector.extract_strided_slice %371 {offsets = [0, 4], sizes = [10, 1], strides = [1, 1]} : vector<10x10xf32> to vector<10x1xf32>
    %393 = vector.extract_strided_slice %369 {offsets = [4, 0], sizes = [1, 128], strides = [1, 1]} : vector<10x128xf32> to vector<1x128xf32>
    %394 = vector.broadcast %392 : vector<10x1xf32> to vector<10x128xf32>
    %395 = vector.broadcast %393 : vector<1x128xf32> to vector<10x128xf32>
    %396 = arith.mulf %394, %395 : vector<10x128xf32>
    %397 = vector.extract_strided_slice %371 {offsets = [0, 5], sizes = [10, 1], strides = [1, 1]} : vector<10x10xf32> to vector<10x1xf32>
    %398 = vector.extract_strided_slice %369 {offsets = [5, 0], sizes = [1, 128], strides = [1, 1]} : vector<10x128xf32> to vector<1x128xf32>
    %399 = vector.broadcast %397 : vector<10x1xf32> to vector<10x128xf32>
    %400 = vector.broadcast %398 : vector<1x128xf32> to vector<10x128xf32>
    %401 = arith.mulf %399, %400 : vector<10x128xf32>
    %402 = vector.extract_strided_slice %371 {offsets = [0, 6], sizes = [10, 1], strides = [1, 1]} : vector<10x10xf32> to vector<10x1xf32>
    %403 = vector.extract_strided_slice %369 {offsets = [6, 0], sizes = [1, 128], strides = [1, 1]} : vector<10x128xf32> to vector<1x128xf32>
    %404 = vector.broadcast %402 : vector<10x1xf32> to vector<10x128xf32>
    %405 = vector.broadcast %403 : vector<1x128xf32> to vector<10x128xf32>
    %406 = arith.mulf %404, %405 : vector<10x128xf32>
    %407 = vector.extract_strided_slice %371 {offsets = [0, 7], sizes = [10, 1], strides = [1, 1]} : vector<10x10xf32> to vector<10x1xf32>
    %408 = vector.extract_strided_slice %369 {offsets = [7, 0], sizes = [1, 128], strides = [1, 1]} : vector<10x128xf32> to vector<1x128xf32>
    %409 = vector.broadcast %407 : vector<10x1xf32> to vector<10x128xf32>
    %410 = vector.broadcast %408 : vector<1x128xf32> to vector<10x128xf32>
    %411 = arith.mulf %409, %410 : vector<10x128xf32>
    %412 = vector.extract_strided_slice %371 {offsets = [0, 8], sizes = [10, 1], strides = [1, 1]} : vector<10x10xf32> to vector<10x1xf32>
    %413 = vector.extract_strided_slice %369 {offsets = [8, 0], sizes = [1, 128], strides = [1, 1]} : vector<10x128xf32> to vector<1x128xf32>
    %414 = vector.broadcast %412 : vector<10x1xf32> to vector<10x128xf32>
    %415 = vector.broadcast %413 : vector<1x128xf32> to vector<10x128xf32>
    %416 = arith.mulf %414, %415 : vector<10x128xf32>
    %417 = vector.extract_strided_slice %371 {offsets = [0, 9], sizes = [10, 1], strides = [1, 1]} : vector<10x10xf32> to vector<10x1xf32>
    %418 = vector.extract_strided_slice %369 {offsets = [9, 0], sizes = [1, 128], strides = [1, 1]} : vector<10x128xf32> to vector<1x128xf32>
    %419 = vector.broadcast %417 : vector<10x1xf32> to vector<10x128xf32>
    %420 = vector.broadcast %418 : vector<1x128xf32> to vector<10x128xf32>
    %421 = arith.mulf %419, %420 : vector<10x128xf32>
    %422 = arith.addf %376, %381 : vector<10x128xf32>
    %423 = arith.addf %386, %391 : vector<10x128xf32>
    %424 = arith.addf %396, %401 : vector<10x128xf32>
    %425 = arith.addf %406, %411 : vector<10x128xf32>
    %426 = arith.addf %416, %421 : vector<10x128xf32>
    %427 = arith.addf %422, %423 : vector<10x128xf32>
    %428 = arith.addf %424, %425 : vector<10x128xf32>
    %429 = arith.addf %427, %428 : vector<10x128xf32>
    %430 = arith.addf %429, %426 : vector<10x128xf32>
    %c0_45 = arith.constant 0 : index
    %c5_46 = arith.constant 5 : index
    %431 = vector.load %arg5[%c0_45, %c5_46] : memref<10x9xf32, #tpu.memory_space<vmem>>, vector<10x1xf32>
    %432 = vector.broadcast %431 : vector<10x1xf32> to vector<10x128xf32>
    %433 = arith.addf %430, %432 : vector<10x128xf32>
    %cst_47 = arith.constant 5.000000e-01 : f32
    %434 = vector.broadcast %cst_47 : f32 to vector<10x128xf32>
    %435 = arith.mulf %433, %434 : vector<10x128xf32>
    %436 = math.tanh %435 : vector<10x128xf32>
    %cst_48 = arith.constant 5.000000e-01 : f32
    %437 = vector.broadcast %cst_48 : f32 to vector<10x128xf32>
    %438 = arith.mulf %436, %437 : vector<10x128xf32>
    %cst_49 = arith.constant 5.000000e-01 : f32
    %439 = vector.broadcast %cst_49 : f32 to vector<10x128xf32>
    %440 = arith.addf %438, %439 : vector<10x128xf32>
    %c6 = arith.constant 6 : index
    %c0_50 = arith.constant 0 : index
    %c0_51 = arith.constant 0 : index
    %441 = vector.load %arg4[%c6, %c0_50, %c0_51] : memref<9x10x10xf32, #tpu.memory_space<vmem>>, vector<1x10x10xf32>
    %442 = vector.shape_cast %441 : vector<1x10x10xf32> to vector<10x10xf32>
    %443 = vector.extract_strided_slice %442 {offsets = [0, 0], sizes = [10, 1], strides = [1, 1]} : vector<10x10xf32> to vector<10x1xf32>
    %444 = vector.extract_strided_slice %440 {offsets = [0, 0], sizes = [1, 128], strides = [1, 1]} : vector<10x128xf32> to vector<1x128xf32>
    %445 = vector.broadcast %443 : vector<10x1xf32> to vector<10x128xf32>
    %446 = vector.broadcast %444 : vector<1x128xf32> to vector<10x128xf32>
    %447 = arith.mulf %445, %446 : vector<10x128xf32>
    %448 = vector.extract_strided_slice %442 {offsets = [0, 1], sizes = [10, 1], strides = [1, 1]} : vector<10x10xf32> to vector<10x1xf32>
    %449 = vector.extract_strided_slice %440 {offsets = [1, 0], sizes = [1, 128], strides = [1, 1]} : vector<10x128xf32> to vector<1x128xf32>
    %450 = vector.broadcast %448 : vector<10x1xf32> to vector<10x128xf32>
    %451 = vector.broadcast %449 : vector<1x128xf32> to vector<10x128xf32>
    %452 = arith.mulf %450, %451 : vector<10x128xf32>
    %453 = vector.extract_strided_slice %442 {offsets = [0, 2], sizes = [10, 1], strides = [1, 1]} : vector<10x10xf32> to vector<10x1xf32>
    %454 = vector.extract_strided_slice %440 {offsets = [2, 0], sizes = [1, 128], strides = [1, 1]} : vector<10x128xf32> to vector<1x128xf32>
    %455 = vector.broadcast %453 : vector<10x1xf32> to vector<10x128xf32>
    %456 = vector.broadcast %454 : vector<1x128xf32> to vector<10x128xf32>
    %457 = arith.mulf %455, %456 : vector<10x128xf32>
    %458 = vector.extract_strided_slice %442 {offsets = [0, 3], sizes = [10, 1], strides = [1, 1]} : vector<10x10xf32> to vector<10x1xf32>
    %459 = vector.extract_strided_slice %440 {offsets = [3, 0], sizes = [1, 128], strides = [1, 1]} : vector<10x128xf32> to vector<1x128xf32>
    %460 = vector.broadcast %458 : vector<10x1xf32> to vector<10x128xf32>
    %461 = vector.broadcast %459 : vector<1x128xf32> to vector<10x128xf32>
    %462 = arith.mulf %460, %461 : vector<10x128xf32>
    %463 = vector.extract_strided_slice %442 {offsets = [0, 4], sizes = [10, 1], strides = [1, 1]} : vector<10x10xf32> to vector<10x1xf32>
    %464 = vector.extract_strided_slice %440 {offsets = [4, 0], sizes = [1, 128], strides = [1, 1]} : vector<10x128xf32> to vector<1x128xf32>
    %465 = vector.broadcast %463 : vector<10x1xf32> to vector<10x128xf32>
    %466 = vector.broadcast %464 : vector<1x128xf32> to vector<10x128xf32>
    %467 = arith.mulf %465, %466 : vector<10x128xf32>
    %468 = vector.extract_strided_slice %442 {offsets = [0, 5], sizes = [10, 1], strides = [1, 1]} : vector<10x10xf32> to vector<10x1xf32>
    %469 = vector.extract_strided_slice %440 {offsets = [5, 0], sizes = [1, 128], strides = [1, 1]} : vector<10x128xf32> to vector<1x128xf32>
    %470 = vector.broadcast %468 : vector<10x1xf32> to vector<10x128xf32>
    %471 = vector.broadcast %469 : vector<1x128xf32> to vector<10x128xf32>
    %472 = arith.mulf %470, %471 : vector<10x128xf32>
    %473 = vector.extract_strided_slice %442 {offsets = [0, 6], sizes = [10, 1], strides = [1, 1]} : vector<10x10xf32> to vector<10x1xf32>
    %474 = vector.extract_strided_slice %440 {offsets = [6, 0], sizes = [1, 128], strides = [1, 1]} : vector<10x128xf32> to vector<1x128xf32>
    %475 = vector.broadcast %473 : vector<10x1xf32> to vector<10x128xf32>
    %476 = vector.broadcast %474 : vector<1x128xf32> to vector<10x128xf32>
    %477 = arith.mulf %475, %476 : vector<10x128xf32>
    %478 = vector.extract_strided_slice %442 {offsets = [0, 7], sizes = [10, 1], strides = [1, 1]} : vector<10x10xf32> to vector<10x1xf32>
    %479 = vector.extract_strided_slice %440 {offsets = [7, 0], sizes = [1, 128], strides = [1, 1]} : vector<10x128xf32> to vector<1x128xf32>
    %480 = vector.broadcast %478 : vector<10x1xf32> to vector<10x128xf32>
    %481 = vector.broadcast %479 : vector<1x128xf32> to vector<10x128xf32>
    %482 = arith.mulf %480, %481 : vector<10x128xf32>
    %483 = vector.extract_strided_slice %442 {offsets = [0, 8], sizes = [10, 1], strides = [1, 1]} : vector<10x10xf32> to vector<10x1xf32>
    %484 = vector.extract_strided_slice %440 {offsets = [8, 0], sizes = [1, 128], strides = [1, 1]} : vector<10x128xf32> to vector<1x128xf32>
    %485 = vector.broadcast %483 : vector<10x1xf32> to vector<10x128xf32>
    %486 = vector.broadcast %484 : vector<1x128xf32> to vector<10x128xf32>
    %487 = arith.mulf %485, %486 : vector<10x128xf32>
    %488 = vector.extract_strided_slice %442 {offsets = [0, 9], sizes = [10, 1], strides = [1, 1]} : vector<10x10xf32> to vector<10x1xf32>
    %489 = vector.extract_strided_slice %440 {offsets = [9, 0], sizes = [1, 128], strides = [1, 1]} : vector<10x128xf32> to vector<1x128xf32>
    %490 = vector.broadcast %488 : vector<10x1xf32> to vector<10x128xf32>
    %491 = vector.broadcast %489 : vector<1x128xf32> to vector<10x128xf32>
    %492 = arith.mulf %490, %491 : vector<10x128xf32>
    %493 = arith.addf %447, %452 : vector<10x128xf32>
    %494 = arith.addf %457, %462 : vector<10x128xf32>
    %495 = arith.addf %467, %472 : vector<10x128xf32>
    %496 = arith.addf %477, %482 : vector<10x128xf32>
    %497 = arith.addf %487, %492 : vector<10x128xf32>
    %498 = arith.addf %493, %494 : vector<10x128xf32>
    %499 = arith.addf %495, %496 : vector<10x128xf32>
    %500 = arith.addf %498, %499 : vector<10x128xf32>
    %501 = arith.addf %500, %497 : vector<10x128xf32>
    %c0_52 = arith.constant 0 : index
    %c6_53 = arith.constant 6 : index
    %502 = vector.load %arg5[%c0_52, %c6_53] : memref<10x9xf32, #tpu.memory_space<vmem>>, vector<10x1xf32>
    %503 = vector.broadcast %502 : vector<10x1xf32> to vector<10x128xf32>
    %504 = arith.addf %501, %503 : vector<10x128xf32>
    %cst_54 = arith.constant 5.000000e-01 : f32
    %505 = vector.broadcast %cst_54 : f32 to vector<10x128xf32>
    %506 = arith.mulf %504, %505 : vector<10x128xf32>
    %507 = math.tanh %506 : vector<10x128xf32>
    %cst_55 = arith.constant 5.000000e-01 : f32
    %508 = vector.broadcast %cst_55 : f32 to vector<10x128xf32>
    %509 = arith.mulf %507, %508 : vector<10x128xf32>
    %cst_56 = arith.constant 5.000000e-01 : f32
    %510 = vector.broadcast %cst_56 : f32 to vector<10x128xf32>
    %511 = arith.addf %509, %510 : vector<10x128xf32>
    %c7 = arith.constant 7 : index
    %c0_57 = arith.constant 0 : index
    %c0_58 = arith.constant 0 : index
    %512 = vector.load %arg4[%c7, %c0_57, %c0_58] : memref<9x10x10xf32, #tpu.memory_space<vmem>>, vector<1x10x10xf32>
    %513 = vector.shape_cast %512 : vector<1x10x10xf32> to vector<10x10xf32>
    %514 = vector.extract_strided_slice %513 {offsets = [0, 0], sizes = [10, 1], strides = [1, 1]} : vector<10x10xf32> to vector<10x1xf32>
    %515 = vector.extract_strided_slice %511 {offsets = [0, 0], sizes = [1, 128], strides = [1, 1]} : vector<10x128xf32> to vector<1x128xf32>
    %516 = vector.broadcast %514 : vector<10x1xf32> to vector<10x128xf32>
    %517 = vector.broadcast %515 : vector<1x128xf32> to vector<10x128xf32>
    %518 = arith.mulf %516, %517 : vector<10x128xf32>
    %519 = vector.extract_strided_slice %513 {offsets = [0, 1], sizes = [10, 1], strides = [1, 1]} : vector<10x10xf32> to vector<10x1xf32>
    %520 = vector.extract_strided_slice %511 {offsets = [1, 0], sizes = [1, 128], strides = [1, 1]} : vector<10x128xf32> to vector<1x128xf32>
    %521 = vector.broadcast %519 : vector<10x1xf32> to vector<10x128xf32>
    %522 = vector.broadcast %520 : vector<1x128xf32> to vector<10x128xf32>
    %523 = arith.mulf %521, %522 : vector<10x128xf32>
    %524 = vector.extract_strided_slice %513 {offsets = [0, 2], sizes = [10, 1], strides = [1, 1]} : vector<10x10xf32> to vector<10x1xf32>
    %525 = vector.extract_strided_slice %511 {offsets = [2, 0], sizes = [1, 128], strides = [1, 1]} : vector<10x128xf32> to vector<1x128xf32>
    %526 = vector.broadcast %524 : vector<10x1xf32> to vector<10x128xf32>
    %527 = vector.broadcast %525 : vector<1x128xf32> to vector<10x128xf32>
    %528 = arith.mulf %526, %527 : vector<10x128xf32>
    %529 = vector.extract_strided_slice %513 {offsets = [0, 3], sizes = [10, 1], strides = [1, 1]} : vector<10x10xf32> to vector<10x1xf32>
    %530 = vector.extract_strided_slice %511 {offsets = [3, 0], sizes = [1, 128], strides = [1, 1]} : vector<10x128xf32> to vector<1x128xf32>
    %531 = vector.broadcast %529 : vector<10x1xf32> to vector<10x128xf32>
    %532 = vector.broadcast %530 : vector<1x128xf32> to vector<10x128xf32>
    %533 = arith.mulf %531, %532 : vector<10x128xf32>
    %534 = vector.extract_strided_slice %513 {offsets = [0, 4], sizes = [10, 1], strides = [1, 1]} : vector<10x10xf32> to vector<10x1xf32>
    %535 = vector.extract_strided_slice %511 {offsets = [4, 0], sizes = [1, 128], strides = [1, 1]} : vector<10x128xf32> to vector<1x128xf32>
    %536 = vector.broadcast %534 : vector<10x1xf32> to vector<10x128xf32>
    %537 = vector.broadcast %535 : vector<1x128xf32> to vector<10x128xf32>
    %538 = arith.mulf %536, %537 : vector<10x128xf32>
    %539 = vector.extract_strided_slice %513 {offsets = [0, 5], sizes = [10, 1], strides = [1, 1]} : vector<10x10xf32> to vector<10x1xf32>
    %540 = vector.extract_strided_slice %511 {offsets = [5, 0], sizes = [1, 128], strides = [1, 1]} : vector<10x128xf32> to vector<1x128xf32>
    %541 = vector.broadcast %539 : vector<10x1xf32> to vector<10x128xf32>
    %542 = vector.broadcast %540 : vector<1x128xf32> to vector<10x128xf32>
    %543 = arith.mulf %541, %542 : vector<10x128xf32>
    %544 = vector.extract_strided_slice %513 {offsets = [0, 6], sizes = [10, 1], strides = [1, 1]} : vector<10x10xf32> to vector<10x1xf32>
    %545 = vector.extract_strided_slice %511 {offsets = [6, 0], sizes = [1, 128], strides = [1, 1]} : vector<10x128xf32> to vector<1x128xf32>
    %546 = vector.broadcast %544 : vector<10x1xf32> to vector<10x128xf32>
    %547 = vector.broadcast %545 : vector<1x128xf32> to vector<10x128xf32>
    %548 = arith.mulf %546, %547 : vector<10x128xf32>
    %549 = vector.extract_strided_slice %513 {offsets = [0, 7], sizes = [10, 1], strides = [1, 1]} : vector<10x10xf32> to vector<10x1xf32>
    %550 = vector.extract_strided_slice %511 {offsets = [7, 0], sizes = [1, 128], strides = [1, 1]} : vector<10x128xf32> to vector<1x128xf32>
    %551 = vector.broadcast %549 : vector<10x1xf32> to vector<10x128xf32>
    %552 = vector.broadcast %550 : vector<1x128xf32> to vector<10x128xf32>
    %553 = arith.mulf %551, %552 : vector<10x128xf32>
    %554 = vector.extract_strided_slice %513 {offsets = [0, 8], sizes = [10, 1], strides = [1, 1]} : vector<10x10xf32> to vector<10x1xf32>
    %555 = vector.extract_strided_slice %511 {offsets = [8, 0], sizes = [1, 128], strides = [1, 1]} : vector<10x128xf32> to vector<1x128xf32>
    %556 = vector.broadcast %554 : vector<10x1xf32> to vector<10x128xf32>
    %557 = vector.broadcast %555 : vector<1x128xf32> to vector<10x128xf32>
    %558 = arith.mulf %556, %557 : vector<10x128xf32>
    %559 = vector.extract_strided_slice %513 {offsets = [0, 9], sizes = [10, 1], strides = [1, 1]} : vector<10x10xf32> to vector<10x1xf32>
    %560 = vector.extract_strided_slice %511 {offsets = [9, 0], sizes = [1, 128], strides = [1, 1]} : vector<10x128xf32> to vector<1x128xf32>
    %561 = vector.broadcast %559 : vector<10x1xf32> to vector<10x128xf32>
    %562 = vector.broadcast %560 : vector<1x128xf32> to vector<10x128xf32>
    %563 = arith.mulf %561, %562 : vector<10x128xf32>
    %564 = arith.addf %518, %523 : vector<10x128xf32>
    %565 = arith.addf %528, %533 : vector<10x128xf32>
    %566 = arith.addf %538, %543 : vector<10x128xf32>
    %567 = arith.addf %548, %553 : vector<10x128xf32>
    %568 = arith.addf %558, %563 : vector<10x128xf32>
    %569 = arith.addf %564, %565 : vector<10x128xf32>
    %570 = arith.addf %566, %567 : vector<10x128xf32>
    %571 = arith.addf %569, %570 : vector<10x128xf32>
    %572 = arith.addf %571, %568 : vector<10x128xf32>
    %c0_59 = arith.constant 0 : index
    %c7_60 = arith.constant 7 : index
    %573 = vector.load %arg5[%c0_59, %c7_60] : memref<10x9xf32, #tpu.memory_space<vmem>>, vector<10x1xf32>
    %574 = vector.broadcast %573 : vector<10x1xf32> to vector<10x128xf32>
    %575 = arith.addf %572, %574 : vector<10x128xf32>
    %cst_61 = arith.constant 5.000000e-01 : f32
    %576 = vector.broadcast %cst_61 : f32 to vector<10x128xf32>
    %577 = arith.mulf %575, %576 : vector<10x128xf32>
    %578 = math.tanh %577 : vector<10x128xf32>
    %cst_62 = arith.constant 5.000000e-01 : f32
    %579 = vector.broadcast %cst_62 : f32 to vector<10x128xf32>
    %580 = arith.mulf %578, %579 : vector<10x128xf32>
    %cst_63 = arith.constant 5.000000e-01 : f32
    %581 = vector.broadcast %cst_63 : f32 to vector<10x128xf32>
    %582 = arith.addf %580, %581 : vector<10x128xf32>
    %c8 = arith.constant 8 : index
    %c0_64 = arith.constant 0 : index
    %c0_65 = arith.constant 0 : index
    %583 = vector.load %arg4[%c8, %c0_64, %c0_65] : memref<9x10x10xf32, #tpu.memory_space<vmem>>, vector<1x10x10xf32>
    %584 = vector.shape_cast %583 : vector<1x10x10xf32> to vector<10x10xf32>
    %585 = vector.extract_strided_slice %584 {offsets = [0, 0], sizes = [10, 1], strides = [1, 1]} : vector<10x10xf32> to vector<10x1xf32>
    %586 = vector.extract_strided_slice %582 {offsets = [0, 0], sizes = [1, 128], strides = [1, 1]} : vector<10x128xf32> to vector<1x128xf32>
    %587 = vector.broadcast %585 : vector<10x1xf32> to vector<10x128xf32>
    %588 = vector.broadcast %586 : vector<1x128xf32> to vector<10x128xf32>
    %589 = arith.mulf %587, %588 : vector<10x128xf32>
    %590 = vector.extract_strided_slice %584 {offsets = [0, 1], sizes = [10, 1], strides = [1, 1]} : vector<10x10xf32> to vector<10x1xf32>
    %591 = vector.extract_strided_slice %582 {offsets = [1, 0], sizes = [1, 128], strides = [1, 1]} : vector<10x128xf32> to vector<1x128xf32>
    %592 = vector.broadcast %590 : vector<10x1xf32> to vector<10x128xf32>
    %593 = vector.broadcast %591 : vector<1x128xf32> to vector<10x128xf32>
    %594 = arith.mulf %592, %593 : vector<10x128xf32>
    %595 = vector.extract_strided_slice %584 {offsets = [0, 2], sizes = [10, 1], strides = [1, 1]} : vector<10x10xf32> to vector<10x1xf32>
    %596 = vector.extract_strided_slice %582 {offsets = [2, 0], sizes = [1, 128], strides = [1, 1]} : vector<10x128xf32> to vector<1x128xf32>
    %597 = vector.broadcast %595 : vector<10x1xf32> to vector<10x128xf32>
    %598 = vector.broadcast %596 : vector<1x128xf32> to vector<10x128xf32>
    %599 = arith.mulf %597, %598 : vector<10x128xf32>
    %600 = vector.extract_strided_slice %584 {offsets = [0, 3], sizes = [10, 1], strides = [1, 1]} : vector<10x10xf32> to vector<10x1xf32>
    %601 = vector.extract_strided_slice %582 {offsets = [3, 0], sizes = [1, 128], strides = [1, 1]} : vector<10x128xf32> to vector<1x128xf32>
    %602 = vector.broadcast %600 : vector<10x1xf32> to vector<10x128xf32>
    %603 = vector.broadcast %601 : vector<1x128xf32> to vector<10x128xf32>
    %604 = arith.mulf %602, %603 : vector<10x128xf32>
    %605 = vector.extract_strided_slice %584 {offsets = [0, 4], sizes = [10, 1], strides = [1, 1]} : vector<10x10xf32> to vector<10x1xf32>
    %606 = vector.extract_strided_slice %582 {offsets = [4, 0], sizes = [1, 128], strides = [1, 1]} : vector<10x128xf32> to vector<1x128xf32>
    %607 = vector.broadcast %605 : vector<10x1xf32> to vector<10x128xf32>
    %608 = vector.broadcast %606 : vector<1x128xf32> to vector<10x128xf32>
    %609 = arith.mulf %607, %608 : vector<10x128xf32>
    %610 = vector.extract_strided_slice %584 {offsets = [0, 5], sizes = [10, 1], strides = [1, 1]} : vector<10x10xf32> to vector<10x1xf32>
    %611 = vector.extract_strided_slice %582 {offsets = [5, 0], sizes = [1, 128], strides = [1, 1]} : vector<10x128xf32> to vector<1x128xf32>
    %612 = vector.broadcast %610 : vector<10x1xf32> to vector<10x128xf32>
    %613 = vector.broadcast %611 : vector<1x128xf32> to vector<10x128xf32>
    %614 = arith.mulf %612, %613 : vector<10x128xf32>
    %615 = vector.extract_strided_slice %584 {offsets = [0, 6], sizes = [10, 1], strides = [1, 1]} : vector<10x10xf32> to vector<10x1xf32>
    %616 = vector.extract_strided_slice %582 {offsets = [6, 0], sizes = [1, 128], strides = [1, 1]} : vector<10x128xf32> to vector<1x128xf32>
    %617 = vector.broadcast %615 : vector<10x1xf32> to vector<10x128xf32>
    %618 = vector.broadcast %616 : vector<1x128xf32> to vector<10x128xf32>
    %619 = arith.mulf %617, %618 : vector<10x128xf32>
    %620 = vector.extract_strided_slice %584 {offsets = [0, 7], sizes = [10, 1], strides = [1, 1]} : vector<10x10xf32> to vector<10x1xf32>
    %621 = vector.extract_strided_slice %582 {offsets = [7, 0], sizes = [1, 128], strides = [1, 1]} : vector<10x128xf32> to vector<1x128xf32>
    %622 = vector.broadcast %620 : vector<10x1xf32> to vector<10x128xf32>
    %623 = vector.broadcast %621 : vector<1x128xf32> to vector<10x128xf32>
    %624 = arith.mulf %622, %623 : vector<10x128xf32>
    %625 = vector.extract_strided_slice %584 {offsets = [0, 8], sizes = [10, 1], strides = [1, 1]} : vector<10x10xf32> to vector<10x1xf32>
    %626 = vector.extract_strided_slice %582 {offsets = [8, 0], sizes = [1, 128], strides = [1, 1]} : vector<10x128xf32> to vector<1x128xf32>
    %627 = vector.broadcast %625 : vector<10x1xf32> to vector<10x128xf32>
    %628 = vector.broadcast %626 : vector<1x128xf32> to vector<10x128xf32>
    %629 = arith.mulf %627, %628 : vector<10x128xf32>
    %630 = vector.extract_strided_slice %584 {offsets = [0, 9], sizes = [10, 1], strides = [1, 1]} : vector<10x10xf32> to vector<10x1xf32>
    %631 = vector.extract_strided_slice %582 {offsets = [9, 0], sizes = [1, 128], strides = [1, 1]} : vector<10x128xf32> to vector<1x128xf32>
    %632 = vector.broadcast %630 : vector<10x1xf32> to vector<10x128xf32>
    %633 = vector.broadcast %631 : vector<1x128xf32> to vector<10x128xf32>
    %634 = arith.mulf %632, %633 : vector<10x128xf32>
    %635 = arith.addf %589, %594 : vector<10x128xf32>
    %636 = arith.addf %599, %604 : vector<10x128xf32>
    %637 = arith.addf %609, %614 : vector<10x128xf32>
    %638 = arith.addf %619, %624 : vector<10x128xf32>
    %639 = arith.addf %629, %634 : vector<10x128xf32>
    %640 = arith.addf %635, %636 : vector<10x128xf32>
    %641 = arith.addf %637, %638 : vector<10x128xf32>
    %642 = arith.addf %640, %641 : vector<10x128xf32>
    %643 = arith.addf %642, %639 : vector<10x128xf32>
    %c0_66 = arith.constant 0 : index
    %c8_67 = arith.constant 8 : index
    %644 = vector.load %arg5[%c0_66, %c8_67] : memref<10x9xf32, #tpu.memory_space<vmem>>, vector<10x1xf32>
    %645 = vector.broadcast %644 : vector<10x1xf32> to vector<10x128xf32>
    %646 = arith.addf %643, %645 : vector<10x128xf32>
    %cst_68 = arith.constant 5.000000e-01 : f32
    %647 = vector.broadcast %cst_68 : f32 to vector<10x128xf32>
    %648 = arith.mulf %646, %647 : vector<10x128xf32>
    %649 = math.tanh %648 : vector<10x128xf32>
    %cst_69 = arith.constant 5.000000e-01 : f32
    %650 = vector.broadcast %cst_69 : f32 to vector<10x128xf32>
    %651 = arith.mulf %649, %650 : vector<10x128xf32>
    %cst_70 = arith.constant 5.000000e-01 : f32
    %652 = vector.broadcast %cst_70 : f32 to vector<10x128xf32>
    %653 = arith.addf %651, %652 : vector<10x128xf32>
    %c0_71 = arith.constant 0 : index
    %c0_72 = arith.constant 0 : index
    %654 = vector.load %arg6[%c0_71, %c0_72] : memref<10x1xf32, #tpu.memory_space<vmem>>, vector<10x1xf32>
    %655 = vector.broadcast %654 : vector<10x1xf32> to vector<10x128xf32>
    %656 = arith.mulf %653, %655 : vector<10x128xf32>
    %cst_73 = arith.constant dense<0.000000e+00> : vector<128xf32>
    %657 = vector.multi_reduction <add>, %656, %cst_73 [0] : vector<10x128xf32> to vector<128xf32>
    %658 = vector.shape_cast %657 : vector<128xf32> to vector<1x128xf32>
    %c0_74 = arith.constant 0 : index
    %c0_75 = arith.constant 0 : index
    %659 = vector.load %arg7[%c0_74, %c0_75] : memref<1x1xf32, #tpu.memory_space<vmem>>, vector<1x1xf32>
    %660 = vector.broadcast %659 : vector<1x1xf32> to vector<1x128xf32>
    %661 = arith.addf %658, %660 : vector<1x128xf32>
    %c0_76 = arith.constant 0 : index
    %c0_77 = arith.constant 0 : index
    %662 = vector.load %arg8[%c0_76, %c0_77] : memref<1x128xf32, #tpu.memory_space<vmem>>, vector<1x128xf32>
    tpu.vector_store %arg8[%c0_76, %c0_77], %661 {strides = array<i32>} : memref<1x128xf32, #tpu.memory_space<vmem>>, vector<1x128xf32>,
    return
  }
  func.func @transform_0(%arg0: i32) -> (i32, i32) {
    %c0_i32 = arith.constant 0 : i32
    %c0_i32_0 = arith.constant 0 : i32
    return %c0_i32, %arg0 : i32, i32
  }
  func.func @transform_1(%arg0: i32) -> (i32, i32) {
    %c0_i32 = arith.constant 0 : i32
    %c0_i32_0 = arith.constant 0 : i32
    %c0_i32_1 = arith.constant 0 : i32
    return %c0_i32, %c0_i32_0 : i32, i32
  }
  func.func @transform_2(%arg0: i32) -> (i32, i32) {
    %c0_i32 = arith.constant 0 : i32
    %c0_i32_0 = arith.constant 0 : i32
    %c0_i32_1 = arith.constant 0 : i32
    return %c0_i32, %c0_i32_0 : i32, i32
  }
  func.func @transform_3(%arg0: i32) -> (i32, i32, i32) {
    %c0_i32 = arith.constant 0 : i32
    %c0_i32_0 = arith.constant 0 : i32
    %c0_i32_1 = arith.constant 0 : i32
    %c0_i32_2 = arith.constant 0 : i32
    return %c0_i32, %c0_i32_0, %c0_i32_1 : i32, i32, i32
  }
  func.func @transform_4(%arg0: i32) -> (i32, i32) {
    %c0_i32 = arith.constant 0 : i32
    %c0_i32_0 = arith.constant 0 : i32
    %c0_i32_1 = arith.constant 0 : i32
    return %c0_i32, %c0_i32_0 : i32, i32
  }
  func.func @transform_5(%arg0: i32) -> (i32, i32) {
    %c0_i32 = arith.constant 0 : i32
    %c0_i32_0 = arith.constant 0 : i32
    %c0_i32_1 = arith.constant 0 : i32
    return %c0_i32, %c0_i32_0 : i32, i32
  }
  func.func @transform_6(%arg0: i32) -> (i32, i32) {
    %c0_i32 = arith.constant 0 : i32
    %c0_i32_0 = arith.constant 0 : i32
    %c0_i32_1 = arith.constant 0 : i32
    return %c0_i32, %c0_i32_0 : i32, i32
  }
  func.func @transform_7(%arg0: i32) -> (i32, i32) {
    %c0_i32 = arith.constant 0 : i32
    %c0_i32_0 = arith.constant 0 : i32
    return %c0_i32, %arg0 : i32, i32
  }
}

</mosaic_0001>

<llo_original>
// kernel: tpu_custom_call.1
$region0: #{tpu_custom_call.1}
  #allocation0 [shape = 'u32[]', space=smem, size = 0x4, offset = 0x4, fixed_abs, tag = 'smem constant byte address 0x4 - core index']
  #allocation1 [shape = 'u32[72,128]{1,0:T(1,128)}', space=vmem, size = 0x9000, scoped, tag = 'internal scratch']
  #allocation2 [shape = 'f32[1,1]{1,0:T(1,128)S(1)}', space=vmem, size = 0x200, scoped, tag = 'scoped memory for tpu_custom_call.1']
  %s0 = inlined_call_operand.vmem [shape: f32[1,128], index: 0, kind: input, shape index: {}]
  %s1 = inlined_call_operand.vmem [shape: f32[10,1], index: 1, kind: input, shape index: {}]
  %s2 = inlined_call_operand.vmem [shape: f32[10,1], index: 2, kind: input, shape index: {}]
  %s3 = inlined_call_operand.hbm [shape: f32[9,10,10], index: 3, kind: input, shape index: {}]
  %s4 = inlined_call_operand.vmem [shape: f32[10,9], index: 4, kind: input, shape index: {}]
  %s5 = inlined_call_operand.vmem [shape: f32[10,1], index: 5, kind: input, shape index: {}]
  %s6 = inlined_call_operand.<no memory space> [shape: f32[1,1], index: 6, kind: input, shape index: {}]
  %s7 = inlined_call_operand.hbm [shape: f32[1,128], index: 7, kind: output, shape index: {}]
  %s8 = sld [smem:[#allocation0]]
  $region42: #{tpu_custom_call.1} parent=0
    _
  %s10 = ssub.s32 1, %s8
  %s11 = scalar_select 0, %s10, %s8
  %v12 = vstv %s6
  %13 = vst [vmem:[#allocation2] sm:$0x1] %v12
  $region1: #{tpu_custom_call.1} parent=0
    #allocation3 [shape = 'u8[73728]{0}', space=vmem, size = 0x12000, scoped, tag = 'input window, operand 3, single buffered']
    #allocation4 [shape = 's32[1]{0}', space=sflag, size = 0x4, scoped, tag = 'scoped memory for tpu_custom_call.1']
    #allocation5 [shape = 's32[1]{0}', space=sflag, size = 0x4, scoped, tag = 'scoped memory for tpu_custom_call.1']
    #allocation6 [shape = 'u8[512]{0}', space=vmem, size = 0x400, scoped, tag = 'output window, operand 0, single buffered']
    %14 = vsyncpa [#allocation4], 0
    %15 = vsyncpa [#allocation5], 0
    // Predicated region
    $region2: #{tpu_custom_call.1} parent=1 // pred_check
      _
    $region3: #{tpu_custom_call.1} parent=1 // pred_check_branch
      %17 = sbr.rel (0) target = $region5
    $region4: #{tpu_custom_call.1} parent=1 // pred_region
      _
    $region5: #{tpu_custom_call.1} parent=1 // pred_fallthru
      _
    // Predicated region
    $region6: #{tpu_custom_call.1} parent=1 // pred_check
      _
    $region7: #{tpu_custom_call.1} parent=1 // pred_check_branch
      %19 = sbr.rel (0) target = $region9
    $region8: #{tpu_custom_call.1} parent=1 // pred_region
      _
    $region9: #{tpu_custom_call.1} parent=1 // pred_fallthru
      _
    // Predicated region
    $region10: #{tpu_custom_call.1} parent=1 // pred_check
      _
    $region11: #{tpu_custom_call.1} parent=1 // pred_check_branch
      %21 = sbr.rel (0) target = $region13
    $region12: #{tpu_custom_call.1} parent=1 // pred_region
      _
    $region13: #{tpu_custom_call.1} parent=1 // pred_fallthru
      _
    // Predicated region
    $region14: #{tpu_custom_call.1} parent=1 // pred_check
      _
    $region15: #{tpu_custom_call.1} parent=1 // pred_check_branch
      %23 = sbr.rel (0) target = $region17
    $region16: #{tpu_custom_call.1} parent=1 // pred_region
      %25 = vsyncadd [#allocation4], 0
      %s26 = sshll.u32 %s3, 4
      %s27 = int_to_ptr.hbm [resolvable:$true] %s26
      %s28 = sshll.u32 [#allocation3], 4
      %s29 = int_to_ptr.vmem [resolvable:$true] %s28
      %34 = dma.hbm_to_vmem [thread:$0]  %s27, 2304, %s29, [#allocation4], 128, 128, 8
    $region17: #{tpu_custom_call.1} parent=1 // pred_fallthru
      _
    // Predicated region
    $region18: #{tpu_custom_call.1} parent=1 // pred_check
      _
    $region19: #{tpu_custom_call.1} parent=1 // pred_check_branch
      %36 = sbr.rel (0) target = $region21
    $region20: #{tpu_custom_call.1} parent=1 // pred_region
      _
    $region21: #{tpu_custom_call.1} parent=1 // pred_fallthru
      _
    // Predicated region
    $region22: #{tpu_custom_call.1} parent=1 // pred_check
      _
    $region23: #{tpu_custom_call.1} parent=1 // pred_check_branch
      %38 = sbr.rel (0) target = $region25
    $region24: #{tpu_custom_call.1} parent=1 // pred_region
      _
    $region25: #{tpu_custom_call.1} parent=1 // pred_fallthru
      _
    // Predicated region
    $region26: #{tpu_custom_call.1} parent=1 // pred_check
      _
    $region27: #{tpu_custom_call.1} parent=1 // pred_check_branch
      %40 = sbr.rel (0) target = $region29
    $region28: #{tpu_custom_call.1} parent=1 // pred_region
      _
    $region29: #{tpu_custom_call.1} parent=1 // pred_fallthru
      _
    // Predicated region
    $region30: #{tpu_custom_call.1} parent=1 // pred_check
      _
    $region31: #{tpu_custom_call.1} parent=1 // pred_check_branch
      %42 = sbr.rel (0) target = $region33
    $region32: #{tpu_custom_call.1} parent=1 // pred_region
      %44 = dma.done [#allocation4], 2304
    $region33: #{tpu_custom_call.1} parent=1 // pred_fallthru
      _
    %v45 = vld [vmem:[%s1] sm:$0xff]
    %v46 = vld [vmem:[%s1 + $0x8] sm:$0x3]
    %v47 = vld [vmem:[%s0] sm:$0x1]
    %49 = vset.pattern.permute.xlu0 0
    %50 = vperm.xlu0 %49, %v45
    %v51 = vpop.permute.xlu0 %50
    %54 = vset.pattern.permute.xlu0 0
    %55 = vperm.xlu0 %54, %v46
    %v56 = vpop.permute.xlu0 %55
    %v59 = vperm.slane %v47, 0
    %v61 = vmul.f32 %v51, %v59
    %v62 = vmul.f32 %v56, %v59
    %v63 = vld [vmem:[%s2] sm:$0xff]
    %v64 = vld [vmem:[%s2 + $0x8] sm:$0x3]
    %66 = vset.pattern.permute.xlu0 0
    %67 = vperm.xlu0 %66, %v63
    %v68 = vpop.permute.xlu0 %67
    %71 = vset.pattern.permute.xlu0 0
    %72 = vperm.xlu0 %71, %v64
    %v73 = vpop.permute.xlu0 %72
    %v75 = vadd.f32 %v61, %v68
    %v76 = vadd.f32 %v62, %v73
    %v77 = vmul.f32 %v75, 0.5
    %v78 = vmul.f32 %v76, 0.5
    %v79 = vtanh.pop %v77
    %v80 = vtanh.pop %v78
    %v81 = vmul.f32 %v79, 0.5
    %v82 = vmul.f32 %v80, 0.5
    %v83 = vadd.f32 %v81, 0.5
    %v84 = vadd.f32 %v82, 0.5
    %v85 = vld [vmem:[#allocation3] sm:$0xff]
    %v86 = vld [vmem:[#allocation3 + $0x8] sm:$0x3]
    %88 = vset.pattern.permute.xlu0 0
    %89 = vperm.xlu0 %88, %v85
    %v90 = vpop.permute.xlu0 %89
    %93 = vset.pattern.permute.xlu0 0
    %94 = vperm.xlu0 %93, %v86
    %v95 = vpop.permute.xlu0 %94
    %v97 = vperm.slane %v83, 0
    %v98 = vmul.f32 %v90, %v97
    %v99 = vmul.f32 %v95, %v97
    %100 = vset.pattern.permute.xlu0 1
    %101 = vperm.xlu0 %100, %v85
    %v102 = vpop.permute.xlu0 %101
    %104 = vset.pattern.permute.xlu0 1
    %105 = vperm.xlu0 %104, %v86
    %v106 = vpop.permute.xlu0 %105
    %v108 = vperm.slane %v83, 1
    %v109 = vmul.f32 %v102, %v108
    %v110 = vmul.f32 %v106, %v108
    %111 = vset.pattern.permute.xlu0 2
    %112 = vperm.xlu0 %111, %v85
    %v113 = vpop.permute.xlu0 %112
    %115 = vset.pattern.permute.xlu0 2
    %116 = vperm.xlu0 %115, %v86
    %v117 = vpop.permute.xlu0 %116
    %v119 = vperm.slane %v83, 2
    %v120 = vmul.f32 %v113, %v119
    %v121 = vmul.f32 %v117, %v119
    %122 = vset.pattern.permute.xlu0 3
    %123 = vperm.xlu0 %122, %v85
    %v124 = vpop.permute.xlu0 %123
    %126 = vset.pattern.permute.xlu0 3
    %127 = vperm.xlu0 %126, %v86
    %v128 = vpop.permute.xlu0 %127
    %v130 = vperm.slane %v83, 3
    %v131 = vmul.f32 %v124, %v130
    %v132 = vmul.f32 %v128, %v130
    %133 = vset.pattern.permute.xlu0 4
    %134 = vperm.xlu0 %133, %v85
    %v135 = vpop.permute.xlu0 %134
    %137 = vset.pattern.permute.xlu0 4
    %138 = vperm.xlu0 %137, %v86
    %v139 = vpop.permute.xlu0 %138
    %v141 = vperm.slane %v83, 4
    %v142 = vmul.f32 %v135, %v141
    %v143 = vmul.f32 %v139, %v141
    %144 = vset.pattern.permute.xlu0 5
    %145 = vperm.xlu0 %144, %v85
    %v146 = vpop.permute.xlu0 %145
    %148 = vset.pattern.permute.xlu0 5
    %149 = vperm.xlu0 %148, %v86
    %v150 = vpop.permute.xlu0 %149
    %v152 = vperm.slane %v83, 5
    %v153 = vmul.f32 %v146, %v152
    %v154 = vmul.f32 %v150, %v152
    %155 = vset.pattern.permute.xlu0 6
    %156 = vperm.xlu0 %155, %v85
    %v157 = vpop.permute.xlu0 %156
    %159 = vset.pattern.permute.xlu0 6
    %160 = vperm.xlu0 %159, %v86
    %v161 = vpop.permute.xlu0 %160
    %v163 = vperm.slane %v83, 6
    %v164 = vmul.f32 %v157, %v163
    %v165 = vmul.f32 %v161, %v163
    %166 = vset.pattern.permute.xlu0 7
    %167 = vperm.xlu0 %166, %v85
    %v168 = vpop.permute.xlu0 %167
    %170 = vset.pattern.permute.xlu0 7
    %171 = vperm.xlu0 %170, %v86
    %v172 = vpop.permute.xlu0 %171
    %v174 = vperm.slane %v83, 7
    %v175 = vmul.f32 %v168, %v174
    %v176 = vmul.f32 %v172, %v174
    %177 = vset.pattern.permute.xlu0 8
    %178 = vperm.xlu0 %177, %v85
    %v179 = vpop.permute.xlu0 %178
    %181 = vset.pattern.permute.xlu0 8
    %182 = vperm.xlu0 %181, %v86
    %v183 = vpop.permute.xlu0 %182
    %v185 = vperm.slane %v84, 0
    %v186 = vmul.f32 %v179, %v185
    %v187 = vmul.f32 %v183, %v185
    %188 = vset.pattern.permute.xlu0 9
    %189 = vperm.xlu0 %188, %v85
    %v190 = vpop.permute.xlu0 %189
    %192 = vset.pattern.permute.xlu0 9
    %193 = vperm.xlu0 %192, %v86
    %v194 = vpop.permute.xlu0 %193
    %v196 = vperm.slane %v84, 1
    %v197 = vmul.f32 %v190, %v196
    %v198 = vmul.f32 %v194, %v196
    %v199 = vadd.f32 %v98, %v109
    %v200 = vadd.f32 %v99, %v110
    %v201 = vadd.f32 %v120, %v131
    %v202 = vadd.f32 %v121, %v132
    %v203 = vadd.f32 %v142, %v153
    %v204 = vadd.f32 %v143, %v154
    %v205 = vadd.f32 %v164, %v175
    %v206 = vadd.f32 %v165, %v176
    %v207 = vadd.f32 %v186, %v197
    %v208 = vadd.f32 %v187, %v198
    %v209 = vadd.f32 %v199, %v201
    %v210 = vadd.f32 %v200, %v202
    %v211 = vadd.f32 %v203, %v205
    %v212 = vadd.f32 %v204, %v206
    %v213 = vadd.f32 %v209, %v211
    %v214 = vadd.f32 %v210, %v212
    %v215 = vadd.f32 %v213, %v207
    %v216 = vadd.f32 %v214, %v208
    %v217 = vld [vmem:[%s4] sm:$0xff]
    %v218 = vld [vmem:[%s4 + $0x8] sm:$0x3]
    %220 = vset.pattern.permute.xlu0 0
    %221 = vperm.xlu0 %220, %v217
    %v222 = vpop.permute.xlu0 %221
    %225 = vset.pattern.permute.xlu0 0
    %226 = vperm.xlu0 %225, %v218
    %v227 = vpop.permute.xlu0 %226
    %v229 = vadd.f32 %v215, %v222
    %v230 = vadd.f32 %v216, %v227
    %v231 = vmul.f32 %v229, 0.5
    %v232 = vmul.f32 %v230, 0.5
    %v233 = vtanh.pop %v231
    %v234 = vtanh.pop %v232
    %v235 = vmul.f32 %v233, 0.5
    %v236 = vmul.f32 %v234, 0.5
    %v237 = vadd.f32 %v235, 0.5
    %v238 = vadd.f32 %v236, 0.5
    %s239 = scalar_lea.vmem [#allocation3], 16
    %v240 = vld [vmem:[%s239] sm:$0xff]
    %v241 = vld [vmem:[%s239 + $0x8] sm:$0x3]
    %243 = vset.pattern.permute.xlu0 0
    %244 = vperm.xlu0 %243, %v240
    %v245 = vpop.permute.xlu0 %244
    %248 = vset.pattern.permute.xlu0 0
    %249 = vperm.xlu0 %248, %v241
    %v250 = vpop.permute.xlu0 %249
    %v252 = vperm.slane %v237, 0
    %v253 = vmul.f32 %v245, %v252
    %v254 = vmul.f32 %v250, %v252
    %255 = vset.pattern.permute.xlu0 1
    %256 = vperm.xlu0 %255, %v240
    %v257 = vpop.permute.xlu0 %256
    %259 = vset.pattern.permute.xlu0 1
    %260 = vperm.xlu0 %259, %v241
    %v261 = vpop.permute.xlu0 %260
    %v263 = vperm.slane %v237, 1
    %v264 = vmul.f32 %v257, %v263
    %v265 = vmul.f32 %v261, %v263
    %266 = vset.pattern.permute.xlu0 2
    %267 = vperm.xlu0 %266, %v240
    %v268 = vpop.permute.xlu0 %267
    %270 = vset.pattern.permute.xlu0 2
    %271 = vperm.xlu0 %270, %v241
    %v272 = vpop.permute.xlu0 %271
    %v274 = vperm.slane %v237, 2
    %v275 = vmul.f32 %v268, %v274
    %v276 = vmul.f32 %v272, %v274
    %277 = vset.pattern.permute.xlu0 3
    %278 = vperm.xlu0 %277, %v240
    %v279 = vpop.permute.xlu0 %278
    %281 = vset.pattern.permute.xlu0 3
    %282 = vperm.xlu0 %281, %v241
    %v283 = vpop.permute.xlu0 %282
    %v285 = vperm.slane %v237, 3
    %v286 = vmul.f32 %v279, %v285
    %v287 = vmul.f32 %v283, %v285
    %288 = vset.pattern.permute.xlu0 4
    %289 = vperm.xlu0 %288, %v240
    %v290 = vpop.permute.xlu0 %289
    %292 = vset.pattern.permute.xlu0 4
    %293 = vperm.xlu0 %292, %v241
    %v294 = vpop.permute.xlu0 %293
    %v296 = vperm.slane %v237, 4
    %v297 = vmul.f32 %v290, %v296
    %v298 = vmul.f32 %v294, %v296
    %299 = vset.pattern.permute.xlu0 5
    %300 = vperm.xlu0 %299, %v240
    %v301 = vpop.permute.xlu0 %300
    %303 = vset.pattern.permute.xlu0 5
    %304 = vperm.xlu0 %303, %v241
    %v305 = vpop.permute.xlu0 %304
    %v307 = vperm.slane %v237, 5
    %v308 = vmul.f32 %v301, %v307
    %v309 = vmul.f32 %v305, %v307
    %310 = vset.pattern.permute.xlu0 6
    %311 = vperm.xlu0 %310, %v240
    %v312 = vpop.permute.xlu0 %311
    %314 = vset.pattern.permute.xlu0 6
    %315 = vperm.xlu0 %314, %v241
    %v316 = vpop.permute.xlu0 %315
    %v318 = vperm.slane %v237, 6
    %v319 = vmul.f32 %v312, %v318
    %v320 = vmul.f32 %v316, %v318
    %321 = vset.pattern.permute.xlu0 7
    %322 = vperm.xlu0 %321, %v240
    %v323 = vpop.permute.xlu0 %322
    %325 = vset.pattern.permute.xlu0 7
    %326 = vperm.xlu0 %325, %v241
    %v327 = vpop.permute.xlu0 %326
    %v329 = vperm.slane %v237, 7
    %v330 = vmul.f32 %v323, %v329
    %v331 = vmul.f32 %v327, %v329
    %332 = vset.pattern.permute.xlu0 8
    %333 = vperm.xlu0 %332, %v240
    %v334 = vpop.permute.xlu0 %333
    %336 = vset.pattern.permute.xlu0 8
    %337 = vperm.xlu0 %336, %v241
    %v338 = vpop.permute.xlu0 %337
    %v340 = vperm.slane %v238, 0
    %v341 = vmul.f32 %v334, %v340
    %v342 = vmul.f32 %v338, %v340
    %343 = vset.pattern.permute.xlu0 9
    %344 = vperm.xlu0 %343, %v240
    %v345 = vpop.permute.xlu0 %344
    %347 = vset.pattern.permute.xlu0 9
    %348 = vperm.xlu0 %347, %v241
    %v349 = vpop.permute.xlu0 %348
    %v351 = vperm.slane %v238, 1
    %v352 = vmul.f32 %v345, %v351
    %v353 = vmul.f32 %v349, %v351
    %v354 = vadd.f32 %v253, %v264
    %v355 = vadd.f32 %v254, %v265
    %v356 = vadd.f32 %v275, %v286
    %v357 = vadd.f32 %v276, %v287
    %v358 = vadd.f32 %v297, %v308
    %v359 = vadd.f32 %v298, %v309
    %v360 = vadd.f32 %v319, %v330
    %v361 = vadd.f32 %v320, %v331
    %v362 = vadd.f32 %v341, %v352
    %v363 = vadd.f32 %v342, %v353
    %v364 = vadd.f32 %v354, %v356
    %v365 = vadd.f32 %v355, %v357
    %v366 = vadd.f32 %v358, %v360
    %v367 = vadd.f32 %v359, %v361
    %v368 = vadd.f32 %v364, %v366
    %v369 = vadd.f32 %v365, %v367
    %v370 = vadd.f32 %v368, %v362
    %v371 = vadd.f32 %v369, %v363
    %372 = vset.pattern.permute.xlu0 1
    %373 = vperm.xlu0 %372, %v217
    %v374 = vpop.permute.xlu0 %373
    %376 = vset.pattern.permute.xlu0 1
    %377 = vperm.xlu0 %376, %v218
    %v378 = vpop.permute.xlu0 %377
    %v380 = vadd.f32 %v370, %v374
    %v381 = vadd.f32 %v371, %v378
    %v382 = vmul.f32 %v380, 0.5
    %v383 = vmul.f32 %v381, 0.5
    %v384 = vtanh.pop %v382
    %v385 = vtanh.pop %v383
    %v386 = vmul.f32 %v384, 0.5
    %v387 = vmul.f32 %v385, 0.5
    %v388 = vadd.f32 %v386, 0.5
    %v389 = vadd.f32 %v387, 0.5
    %s390 = scalar_lea.vmem [#allocation3], 32
    %v391 = vld [vmem:[%s390] sm:$0xff]
    %v392 = vld [vmem:[%s390 + $0x8] sm:$0x3]
    %394 = vset.pattern.permute.xlu0 0
    %395 = vperm.xlu0 %394, %v391
    %v396 = vpop.permute.xlu0 %395
    %399 = vset.pattern.permute.xlu0 0
    %400 = vperm.xlu0 %399, %v392
    %v401 = vpop.permute.xlu0 %400
    %v403 = vperm.slane %v388, 0
    %v404 = vmul.f32 %v396, %v403
    %v405 = vmul.f32 %v401, %v403
    %406 = vset.pattern.permute.xlu0 1
    %407 = vperm.xlu0 %406, %v391
    %v408 = vpop.permute.xlu0 %407
    %410 = vset.pattern.permute.xlu0 1
    %411 = vperm.xlu0 %410, %v392
    %v412 = vpop.permute.xlu0 %411
    %v414 = vperm.slane %v388, 1
    %v415 = vmul.f32 %v408, %v414
    %v416 = vmul.f32 %v412, %v414
    %417 = vset.pattern.permute.xlu0 2
    %418 = vperm.xlu0 %417, %v391
    %v419 = vpop.permute.xlu0 %418
    %421 = vset.pattern.permute.xlu0 2
    %422 = vperm.xlu0 %421, %v392
    %v423 = vpop.permute.xlu0 %422
    %v425 = vperm.slane %v388, 2
    %v426 = vmul.f32 %v419, %v425
    %v427 = vmul.f32 %v423, %v425
    %428 = vset.pattern.permute.xlu0 3
    %429 = vperm.xlu0 %428, %v391
    %v430 = vpop.permute.xlu0 %429
    %432 = vset.pattern.permute.xlu0 3
    %433 = vperm.xlu0 %432, %v392
    %v434 = vpop.permute.xlu0 %433
    %v436 = vperm.slane %v388, 3
    %v437 = vmul.f32 %v430, %v436
    %v438 = vmul.f32 %v434, %v436
    %439 = vset.pattern.permute.xlu0 4
    %440 = vperm.xlu0 %439, %v391
    %v441 = vpop.permute.xlu0 %440
    %443 = vset.pattern.permute.xlu0 4
    %444 = vperm.xlu0 %443, %v392
    %v445 = vpop.permute.xlu0 %444
    %v447 = vperm.slane %v388, 4
    %v448 = vmul.f32 %v441, %v447
    %v449 = vmul.f32 %v445, %v447
    %450 = vset.pattern.permute.xlu0 5
    %451 = vperm.xlu0 %450, %v391
    %v452 = vpop.permute.xlu0 %451
    %454 = vset.pattern.permute.xlu0 5
    %455 = vperm.xlu0 %454, %v392
    %v456 = vpop.permute.xlu0 %455
    %v458 = vperm.slane %v388, 5
    %v459 = vmul.f32 %v452, %v458
    %v460 = vmul.f32 %v456, %v458
    %461 = vset.pattern.permute.xlu0 6
    %462 = vperm.xlu0 %461, %v391
    %v463 = vpop.permute.xlu0 %462
    %465 = vset.pattern.permute.xlu0 6
    %466 = vperm.xlu0 %465, %v392
    %v467 = vpop.permute.xlu0 %466
    %v469 = vperm.slane %v388, 6
    %v470 = vmul.f32 %v463, %v469
    %v471 = vmul.f32 %v467, %v469
    %472 = vset.pattern.permute.xlu0 7
    %473 = vperm.xlu0 %472, %v391
    %v474 = vpop.permute.xlu0 %473
    %476 = vset.pattern.permute.xlu0 7
    %477 = vperm.xlu0 %476, %v392
    %v478 = vpop.permute.xlu0 %477
    %v480 = vperm.slane %v388, 7
    %v481 = vmul.f32 %v474, %v480
    %v482 = vmul.f32 %v478, %v480
    %483 = vset.pattern.permute.xlu0 8
    %484 = vperm.xlu0 %483, %v391
    %v485 = vpop.permute.xlu0 %484
    %487 = vset.pattern.permute.xlu0 8
    %488 = vperm.xlu0 %487, %v392
    %v489 = vpop.permute.xlu0 %488
    %v491 = vperm.slane %v389, 0
    %v492 = vmul.f32 %v485, %v491
    %v493 = vmul.f32 %v489, %v491
    %494 = vset.pattern.permute.xlu0 9
    %495 = vperm.xlu0 %494, %v391
    %v496 = vpop.permute.xlu0 %495
    %498 = vset.pattern.permute.xlu0 9
    %499 = vperm.xlu0 %498, %v392
    %v500 = vpop.permute.xlu0 %499
    %v502 = vperm.slane %v389, 1
    %v503 = vmul.f32 %v496, %v502
    %v504 = vmul.f32 %v500, %v502
    %v505 = vadd.f32 %v404, %v415
    %v506 = vadd.f32 %v405, %v416
    %v507 = vadd.f32 %v426, %v437
    %v508 = vadd.f32 %v427, %v438
    %v509 = vadd.f32 %v448, %v459
    %v510 = vadd.f32 %v449, %v460
    %v511 = vadd.f32 %v470, %v481
    %v512 = vadd.f32 %v471, %v482
    %v513 = vadd.f32 %v492, %v503
    %v514 = vadd.f32 %v493, %v504
    %v515 = vadd.f32 %v505, %v507
    %v516 = vadd.f32 %v506, %v508
    %v517 = vadd.f32 %v509, %v511
    %v518 = vadd.f32 %v510, %v512
    %v519 = vadd.f32 %v515, %v517
    %v520 = vadd.f32 %v516, %v518
    %v521 = vadd.f32 %v519, %v513
    %v522 = vadd.f32 %v520, %v514
    %523 = vset.pattern.permute.xlu0 2
    %524 = vperm.xlu0 %523, %v217
    %v525 = vpop.permute.xlu0 %524
    %527 = vset.pattern.permute.xlu0 2
    %528 = vperm.xlu0 %527, %v218
    %v529 = vpop.permute.xlu0 %528
    %v531 = vadd.f32 %v521, %v525
    %v532 = vadd.f32 %v522, %v529
    %v533 = vmul.f32 %v531, 0.5
    %v534 = vmul.f32 %v532, 0.5
    %v535 = vtanh.pop %v533
    %v536 = vtanh.pop %v534
    %v537 = vmul.f32 %v535, 0.5
    %v538 = vmul.f32 %v536, 0.5
    %v539 = vadd.f32 %v537, 0.5
    %v540 = vadd.f32 %v538, 0.5
    %s541 = scalar_lea.vmem [#allocation3], 48
    %v542 = vld [vmem:[%s541] sm:$0xff]
    %v543 = vld [vmem:[%s541 + $0x8] sm:$0x3]
    %545 = vset.pattern.permute.xlu0 0
    %546 = vperm.xlu0 %545, %v542
    %v547 = vpop.permute.xlu0 %546
    %550 = vset.pattern.permute.xlu0 0
    %551 = vperm.xlu0 %550, %v543
    %v552 = vpop.permute.xlu0 %551
    %v554 = vperm.slane %v539, 0
    %v555 = vmul.f32 %v547, %v554
    %v556 = vmul.f32 %v552, %v554
    %557 = vset.pattern.permute.xlu0 1
    %558 = vperm.xlu0 %557, %v542
    %v559 = vpop.permute.xlu0 %558
    %561 = vset.pattern.permute.xlu0 1
    %562 = vperm.xlu0 %561, %v543
    %v563 = vpop.permute.xlu0 %562
    %v565 = vperm.slane %v539, 1
    %v566 = vmul.f32 %v559, %v565
    %v567 = vmul.f32 %v563, %v565
    %568 = vset.pattern.permute.xlu0 2
    %569 = vperm.xlu0 %568, %v542
    %v570 = vpop.permute.xlu0 %569
    %572 = vset.pattern.permute.xlu0 2
    %573 = vperm.xlu0 %572, %v543
    %v574 = vpop.permute.xlu0 %573
    %v576 = vperm.slane %v539, 2
    %v577 = vmul.f32 %v570, %v576
    %v578 = vmul.f32 %v574, %v576
    %579 = vset.pattern.permute.xlu0 3
    %580 = vperm.xlu0 %579, %v542
    %v581 = vpop.permute.xlu0 %580
    %583 = vset.pattern.permute.xlu0 3
    %584 = vperm.xlu0 %583, %v543
    %v585 = vpop.permute.xlu0 %584
    %v587 = vperm.slane %v539, 3
    %v588 = vmul.f32 %v581, %v587
    %v589 = vmul.f32 %v585, %v587
    %590 = vset.pattern.permute.xlu0 4
    %591 = vperm.xlu0 %590, %v542
    %v592 = vpop.permute.xlu0 %591
    %594 = vset.pattern.permute.xlu0 4
    %595 = vperm.xlu0 %594, %v543
    %v596 = vpop.permute.xlu0 %595
    %v598 = vperm.slane %v539, 4
    %v599 = vmul.f32 %v592, %v598
    %v600 = vmul.f32 %v596, %v598
    %601 = vset.pattern.permute.xlu0 5
    %602 = vperm.xlu0 %601, %v542
    %v603 = vpop.permute.xlu0 %602
    %605 = vset.pattern.permute.xlu0 5
    %606 = vperm.xlu0 %605, %v543
    %v607 = vpop.permute.xlu0 %606
    %v609 = vperm.slane %v539, 5
    %v610 = vmul.f32 %v603, %v609
    %v611 = vmul.f32 %v607, %v609
    %612 = vset.pattern.permute.xlu0 6
    %613 = vperm.xlu0 %612, %v542
    %v614 = vpop.permute.xlu0 %613
    %616 = vset.pattern.permute.xlu0 6
    %617 = vperm.xlu0 %616, %v543
    %v618 = vpop.permute.xlu0 %617
    %v620 = vperm.slane %v539, 6
    %v621 = vmul.f32 %v614, %v620
    %v622 = vmul.f32 %v618, %v620
    %623 = vset.pattern.permute.xlu0 7
    %624 = vperm.xlu0 %623, %v542
    %v625 = vpop.permute.xlu0 %624
    %627 = vset.pattern.permute.xlu0 7
    %628 = vperm.xlu0 %627, %v543
    %v629 = vpop.permute.xlu0 %628
    %v631 = vperm.slane %v539, 7
    %v632 = vmul.f32 %v625, %v631
    %v633 = vmul.f32 %v629, %v631
    %634 = vset.pattern.permute.xlu0 8
    %635 = vperm.xlu0 %634, %v542
    %v636 = vpop.permute.xlu0 %635
    %638 = vset.pattern.permute.xlu0 8
    %639 = vperm.xlu0 %638, %v543
    %v640 = vpop.permute.xlu0 %639
    %v642 = vperm.slane %v540, 0
    %v643 = vmul.f32 %v636, %v642
    %v644 = vmul.f32 %v640, %v642
    %645 = vset.pattern.permute.xlu0 9
    %646 = vperm.xlu0 %645, %v542
    %v647 = vpop.permute.xlu0 %646
    %649 = vset.pattern.permute.xlu0 9
    %650 = vperm.xlu0 %649, %v543
    %v651 = vpop.permute.xlu0 %650
    %v653 = vperm.slane %v540, 1
    %v654 = vmul.f32 %v647, %v653
    %v655 = vmul.f32 %v651, %v653
    %v656 = vadd.f32 %v555, %v566
    %v657 = vadd.f32 %v556, %v567
    %v658 = vadd.f32 %v577, %v588
    %v659 = vadd.f32 %v578, %v589
    %v660 = vadd.f32 %v599, %v610
    %v661 = vadd.f32 %v600, %v611
    %v662 = vadd.f32 %v621, %v632
    %v663 = vadd.f32 %v622, %v633
    %v664 = vadd.f32 %v643, %v654
    %v665 = vadd.f32 %v644, %v655
    %v666 = vadd.f32 %v656, %v658
    %v667 = vadd.f32 %v657, %v659
    %v668 = vadd.f32 %v660, %v662
    %v669 = vadd.f32 %v661, %v663
    %v670 = vadd.f32 %v666, %v668
    %v671 = vadd.f32 %v667, %v669
    %v672 = vadd.f32 %v670, %v664
    %v673 = vadd.f32 %v671, %v665
    %674 = vset.pattern.permute.xlu0 3
    %675 = vperm.xlu0 %674, %v217
    %v676 = vpop.permute.xlu0 %675
    %678 = vset.pattern.permute.xlu0 3
    %679 = vperm.xlu0 %678, %v218
    %v680 = vpop.permute.xlu0 %679
    %v682 = vadd.f32 %v672, %v676
    %v683 = vadd.f32 %v673, %v680
    %v684 = vmul.f32 %v682, 0.5
    %v685 = vmul.f32 %v683, 0.5
    %v686 = vtanh.pop %v684
    %v687 = vtanh.pop %v685
    %v688 = vmul.f32 %v686, 0.5
    %v689 = vmul.f32 %v687, 0.5
    %v690 = vadd.f32 %v688, 0.5
    %v691 = vadd.f32 %v689, 0.5
    %s692 = scalar_lea.vmem [#allocation3], 64
    %v693 = vld [vmem:[%s692] sm:$0xff]
    %v694 = vld [vmem:[%s692 + $0x8] sm:$0x3]
    %696 = vset.pattern.permute.xlu0 0
    %697 = vperm.xlu0 %696, %v693
    %v698 = vpop.permute.xlu0 %697
    %701 = vset.pattern.permute.xlu0 0
    %702 = vperm.xlu0 %701, %v694
    %v703 = vpop.permute.xlu0 %702
    %v705 = vperm.slane %v690, 0
    %v706 = vmul.f32 %v698, %v705
    %v707 = vmul.f32 %v703, %v705
    %708 = vset.pattern.permute.xlu0 1
    %709 = vperm.xlu0 %708, %v693
    %v710 = vpop.permute.xlu0 %709
    %712 = vset.pattern.permute.xlu0 1
    %713 = vperm.xlu0 %712, %v694
    %v714 = vpop.permute.xlu0 %713
    %v716 = vperm.slane %v690, 1
    %v717 = vmul.f32 %v710, %v716
    %v718 = vmul.f32 %v714, %v716
    %719 = vset.pattern.permute.xlu0 2
    %720 = vperm.xlu0 %719, %v693
    %v721 = vpop.permute.xlu0 %720
    %723 = vset.pattern.permute.xlu0 2
    %724 = vperm.xlu0 %723, %v694
    %v725 = vpop.permute.xlu0 %724
    %v727 = vperm.slane %v690, 2
    %v728 = vmul.f32 %v721, %v727
    %v729 = vmul.f32 %v725, %v727
    %730 = vset.pattern.permute.xlu0 3
    %731 = vperm.xlu0 %730, %v693
    %v732 = vpop.permute.xlu0 %731
    %734 = vset.pattern.permute.xlu0 3
    %735 = vperm.xlu0 %734, %v694
    %v736 = vpop.permute.xlu0 %735
    %v738 = vperm.slane %v690, 3
    %v739 = vmul.f32 %v732, %v738
    %v740 = vmul.f32 %v736, %v738
    %741 = vset.pattern.permute.xlu0 4
    %742 = vperm.xlu0 %741, %v693
    %v743 = vpop.permute.xlu0 %742
    %745 = vset.pattern.permute.xlu0 4
    %746 = vperm.xlu0 %745, %v694
    %v747 = vpop.permute.xlu0 %746
    %v749 = vperm.slane %v690, 4
    %v750 = vmul.f32 %v743, %v749
    %v751 = vmul.f32 %v747, %v749
    %752 = vset.pattern.permute.xlu0 5
    %753 = vperm.xlu0 %752, %v693
    %v754 = vpop.permute.xlu0 %753
    %756 = vset.pattern.permute.xlu0 5
    %757 = vperm.xlu0 %756, %v694
    %v758 = vpop.permute.xlu0 %757
    %v760 = vperm.slane %v690, 5
    %v761 = vmul.f32 %v754, %v760
    %v762 = vmul.f32 %v758, %v760
    %763 = vset.pattern.permute.xlu0 6
    %764 = vperm.xlu0 %763, %v693
    %v765 = vpop.permute.xlu0 %764
    %767 = vset.pattern.permute.xlu0 6
    %768 = vperm.xlu0 %767, %v694
    %v769 = vpop.permute.xlu0 %768
    %v771 = vperm.slane %v690, 6
    %v772 = vmul.f32 %v765, %v771
    %v773 = vmul.f32 %v769, %v771
    %774 = vset.pattern.permute.xlu0 7
    %775 = vperm.xlu0 %774, %v693
    %v776 = vpop.permute.xlu0 %775
    %778 = vset.pattern.permute.xlu0 7
    %779 = vperm.xlu0 %778, %v694
    %v780 = vpop.permute.xlu0 %779
    %v782 = vperm.slane %v690, 7
    %v783 = vmul.f32 %v776, %v782
    %v784 = vmul.f32 %v780, %v782
    %785 = vset.pattern.permute.xlu0 8
    %786 = vperm.xlu0 %785, %v693
    %v787 = vpop.permute.xlu0 %786
    %789 = vset.pattern.permute.xlu0 8
    %790 = vperm.xlu0 %789, %v694
    %v791 = vpop.permute.xlu0 %790
    %v793 = vperm.slane %v691, 0
    %v794 = vmul.f32 %v787, %v793
    %v795 = vmul.f32 %v791, %v793
    %796 = vset.pattern.permute.xlu0 9
    %797 = vperm.xlu0 %796, %v693
    %v798 = vpop.permute.xlu0 %797
    %800 = vset.pattern.permute.xlu0 9
    %801 = vperm.xlu0 %800, %v694
    %v802 = vpop.permute.xlu0 %801
    %v804 = vperm.slane %v691, 1
    %v805 = vmul.f32 %v798, %v804
    %v806 = vmul.f32 %v802, %v804
    %v807 = vadd.f32 %v706, %v717
    %v808 = vadd.f32 %v707, %v718
    %v809 = vadd.f32 %v728, %v739
    %v810 = vadd.f32 %v729, %v740
    %v811 = vadd.f32 %v750, %v761
    %v812 = vadd.f32 %v751, %v762
    %v813 = vadd.f32 %v772, %v783
    %v814 = vadd.f32 %v773, %v784
    %v815 = vadd.f32 %v794, %v805
    %v816 = vadd.f32 %v795, %v806
    %v817 = vadd.f32 %v807, %v809
    %v818 = vadd.f32 %v808, %v810
    %v819 = vadd.f32 %v811, %v813
    %v820 = vadd.f32 %v812, %v814
    %v821 = vadd.f32 %v817, %v819
    %v822 = vadd.f32 %v818, %v820
    %v823 = vadd.f32 %v821, %v815
    %v824 = vadd.f32 %v822, %v816
    %825 = vset.pattern.permute.xlu0 4
    %826 = vperm.xlu0 %825, %v217
    %v827 = vpop.permute.xlu0 %826
    %829 = vset.pattern.permute.xlu0 4
    %830 = vperm.xlu0 %829, %v218
    %v831 = vpop.permute.xlu0 %830
    %v833 = vadd.f32 %v823, %v827
    %v834 = vadd.f32 %v824, %v831
    %v835 = vmul.f32 %v833, 0.5
    %v836 = vmul.f32 %v834, 0.5
    %v837 = vtanh.pop %v835
    %v838 = vtanh.pop %v836
    %v839 = vmul.f32 %v837, 0.5
    %v840 = vmul.f32 %v838, 0.5
    %v841 = vadd.f32 %v839, 0.5
    %v842 = vadd.f32 %v840, 0.5
    %s843 = scalar_lea.vmem [#allocation3], 80
    %v844 = vld [vmem:[%s843] sm:$0xff]
    %v845 = vld [vmem:[%s843 + $0x8] sm:$0x3]
    %847 = vset.pattern.permute.xlu0 0
    %848 = vperm.xlu0 %847, %v844
    %v849 = vpop.permute.xlu0 %848
    %852 = vset.pattern.permute.xlu0 0
    %853 = vperm.xlu0 %852, %v845
    %v854 = vpop.permute.xlu0 %853
    %v856 = vperm.slane %v841, 0
    %v857 = vmul.f32 %v849, %v856
    %v858 = vmul.f32 %v854, %v856
    %859 = vset.pattern.permute.xlu0 1
    %860 = vperm.xlu0 %859, %v844
    %v861 = vpop.permute.xlu0 %860
    %863 = vset.pattern.permute.xlu0 1
    %864 = vperm.xlu0 %863, %v845
    %v865 = vpop.permute.xlu0 %864
    %v867 = vperm.slane %v841, 1
    %v868 = vmul.f32 %v861, %v867
    %v869 = vmul.f32 %v865, %v867
    %870 = vset.pattern.permute.xlu0 2
    %871 = vperm.xlu0 %870, %v844
    %v872 = vpop.permute.xlu0 %871
    %874 = vset.pattern.permute.xlu0 2
    %875 = vperm.xlu0 %874, %v845
    %v876 = vpop.permute.xlu0 %875
    %v878 = vperm.slane %v841, 2
    %v879 = vmul.f32 %v872, %v878
    %v880 = vmul.f32 %v876, %v878
    %881 = vset.pattern.permute.xlu0 3
    %882 = vperm.xlu0 %881, %v844
    %v883 = vpop.permute.xlu0 %882
    %885 = vset.pattern.permute.xlu0 3
    %886 = vperm.xlu0 %885, %v845
    %v887 = vpop.permute.xlu0 %886
    %v889 = vperm.slane %v841, 3
    %v890 = vmul.f32 %v883, %v889
    %v891 = vmul.f32 %v887, %v889
    %892 = vset.pattern.permute.xlu0 4
    %893 = vperm.xlu0 %892, %v844
    %v894 = vpop.permute.xlu0 %893
    %896 = vset.pattern.permute.xlu0 4
    %897 = vperm.xlu0 %896, %v845
    %v898 = vpop.permute.xlu0 %897
    %v900 = vperm.slane %v841, 4
    %v901 = vmul.f32 %v894, %v900
    %v902 = vmul.f32 %v898, %v900
    %903 = vset.pattern.permute.xlu0 5
    %904 = vperm.xlu0 %903, %v844
    %v905 = vpop.permute.xlu0 %904
    %907 = vset.pattern.permute.xlu0 5
    %908 = vperm.xlu0 %907, %v845
    %v909 = vpop.permute.xlu0 %908
    %v911 = vperm.slane %v841, 5
    %v912 = vmul.f32 %v905, %v911
    %v913 = vmul.f32 %v909, %v911
    %914 = vset.pattern.permute.xlu0 6
    %915 = vperm.xlu0 %914, %v844
    %v916 = vpop.permute.xlu0 %915
    %918 = vset.pattern.permute.xlu0 6
    %919 = vperm.xlu0 %918, %v845
    %v920 = vpop.permute.xlu0 %919
    %v922 = vperm.slane %v841, 6
    %v923 = vmul.f32 %v916, %v922
    %v924 = vmul.f32 %v920, %v922
    %925 = vset.pattern.permute.xlu0 7
    %926 = vperm.xlu0 %925, %v844
    %v927 = vpop.permute.xlu0 %926
    %929 = vset.pattern.permute.xlu0 7
    %930 = vperm.xlu0 %929, %v845
    %v931 = vpop.permute.xlu0 %930
    %v933 = vperm.slane %v841, 7
    %v934 = vmul.f32 %v927, %v933
    %v935 = vmul.f32 %v931, %v933
    %936 = vset.pattern.permute.xlu0 8
    %937 = vperm.xlu0 %936, %v844
    %v938 = vpop.permute.xlu0 %937
    %940 = vset.pattern.permute.xlu0 8
    %941 = vperm.xlu0 %940, %v845
    %v942 = vpop.permute.xlu0 %941
    %v944 = vperm.slane %v842, 0
    %v945 = vmul.f32 %v938, %v944
    %v946 = vmul.f32 %v942, %v944
    %947 = vset.pattern.permute.xlu0 9
    %948 = vperm.xlu0 %947, %v844
    %v949 = vpop.permute.xlu0 %948
    %951 = vset.pattern.permute.xlu0 9
    %952 = vperm.xlu0 %951, %v845
    %v953 = vpop.permute.xlu0 %952
    %v955 = vperm.slane %v842, 1
    %v956 = vmul.f32 %v949, %v955
    %v957 = vmul.f32 %v953, %v955
    %v958 = vadd.f32 %v857, %v868
    %v959 = vadd.f32 %v858, %v869
    %v960 = vadd.f32 %v879, %v890
    %v961 = vadd.f32 %v880, %v891
    %v962 = vadd.f32 %v901, %v912
    %v963 = vadd.f32 %v902, %v913
    %v964 = vadd.f32 %v923, %v934
    %v965 = vadd.f32 %v924, %v935
    %v966 = vadd.f32 %v945, %v956
    %v967 = vadd.f32 %v946, %v957
    %v968 = vadd.f32 %v958, %v960
    %v969 = vadd.f32 %v959, %v961
    %v970 = vadd.f32 %v962, %v964
    %v971 = vadd.f32 %v963, %v965
    %v972 = vadd.f32 %v968, %v970
    %v973 = vadd.f32 %v969, %v971
    %v974 = vadd.f32 %v972, %v966
    %v975 = vadd.f32 %v973, %v967
    %976 = vset.pattern.permute.xlu0 5
    %977 = vperm.xlu0 %976, %v217
    %v978 = vpop.permute.xlu0 %977
    %980 = vset.pattern.permute.xlu0 5
    %981 = vperm.xlu0 %980, %v218
    %v982 = vpop.permute.xlu0 %981
    %v984 = vadd.f32 %v974, %v978
    %v985 = vadd.f32 %v975, %v982
    %v986 = vmul.f32 %v984, 0.5
    %v987 = vmul.f32 %v985, 0.5
    %v988 = vtanh.pop %v986
    %v989 = vtanh.pop %v987
    %v990 = vmul.f32 %v988, 0.5
    %v991 = vmul.f32 %v989, 0.5
    %v992 = vadd.f32 %v990, 0.5
    %v993 = vadd.f32 %v991, 0.5
    %s994 = scalar_lea.vmem [#allocation3], 96
    %v995 = vld [vmem:[%s994] sm:$0xff]
    %v996 = vld [vmem:[%s994 + $0x8] sm:$0x3]
    %998 = vset.pattern.permute.xlu0 0
    %999 = vperm.xlu0 %998, %v995
    %v1000 = vpop.permute.xlu0 %999
    %1003 = vset.pattern.permute.xlu0 0
    %1004 = vperm.xlu0 %1003, %v996
    %v1005 = vpop.permute.xlu0 %1004
    %v1007 = vperm.slane %v992, 0
    %v1008 = vmul.f32 %v1000, %v1007
    %v1009 = vmul.f32 %v1005, %v1007
    %1010 = vset.pattern.permute.xlu0 1
    %1011 = vperm.xlu0 %1010, %v995
    %v1012 = vpop.permute.xlu0 %1011
    %1014 = vset.pattern.permute.xlu0 1
    %1015 = vperm.xlu0 %1014, %v996
    %v1016 = vpop.permute.xlu0 %1015
    %v1018 = vperm.slane %v992, 1
    %v1019 = vmul.f32 %v1012, %v1018
    %v1020 = vmul.f32 %v1016, %v1018
    %1021 = vset.pattern.permute.xlu0 2
    %1022 = vperm.xlu0 %1021, %v995
    %v1023 = vpop.permute.xlu0 %1022
    %1025 = vset.pattern.permute.xlu0 2
    %1026 = vperm.xlu0 %1025, %v996
    %v1027 = vpop.permute.xlu0 %1026
    %v1029 = vperm.slane %v992, 2
    %v1030 = vmul.f32 %v1023, %v1029
    %v1031 = vmul.f32 %v1027, %v1029
    %1032 = vset.pattern.permute.xlu0 3
    %1033 = vperm.xlu0 %1032, %v995
    %v1034 = vpop.permute.xlu0 %1033
    %1036 = vset.pattern.permute.xlu0 3
    %1037 = vperm.xlu0 %1036, %v996
    %v1038 = vpop.permute.xlu0 %1037
    %v1040 = vperm.slane %v992, 3
    %v1041 = vmul.f32 %v1034, %v1040
    %v1042 = vmul.f32 %v1038, %v1040
    %1043 = vset.pattern.permute.xlu0 4
    %1044 = vperm.xlu0 %1043, %v995
    %v1045 = vpop.permute.xlu0 %1044
    %1047 = vset.pattern.permute.xlu0 4
    %1048 = vperm.xlu0 %1047, %v996
    %v1049 = vpop.permute.xlu0 %1048
    %v1051 = vperm.slane %v992, 4
    %v1052 = vmul.f32 %v1045, %v1051
    %v1053 = vmul.f32 %v1049, %v1051
    %1054 = vset.pattern.permute.xlu0 5
    %1055 = vperm.xlu0 %1054, %v995
    %v1056 = vpop.permute.xlu0 %1055
    %1058 = vset.pattern.permute.xlu0 5
    %1059 = vperm.xlu0 %1058, %v996
    %v1060 = vpop.permute.xlu0 %1059
    %v1062 = vperm.slane %v992, 5
    %v1063 = vmul.f32 %v1056, %v1062
    %v1064 = vmul.f32 %v1060, %v1062
    %1065 = vset.pattern.permute.xlu0 6
    %1066 = vperm.xlu0 %1065, %v995
    %v1067 = vpop.permute.xlu0 %1066
    %1069 = vset.pattern.permute.xlu0 6
    %1070 = vperm.xlu0 %1069, %v996
    %v1071 = vpop.permute.xlu0 %1070
    %v1073 = vperm.slane %v992, 6
    %v1074 = vmul.f32 %v1067, %v1073
    %v1075 = vmul.f32 %v1071, %v1073
    %1076 = vset.pattern.permute.xlu0 7
    %1077 = vperm.xlu0 %1076, %v995
    %v1078 = vpop.permute.xlu0 %1077
    %1080 = vset.pattern.permute.xlu0 7
    %1081 = vperm.xlu0 %1080, %v996
    %v1082 = vpop.permute.xlu0 %1081
    %v1084 = vperm.slane %v992, 7
    %v1085 = vmul.f32 %v1078, %v1084
    %v1086 = vmul.f32 %v1082, %v1084
    %1087 = vset.pattern.permute.xlu0 8
    %1088 = vperm.xlu0 %1087, %v995
    %v1089 = vpop.permute.xlu0 %1088
    %1091 = vset.pattern.permute.xlu0 8
    %1092 = vperm.xlu0 %1091, %v996
    %v1093 = vpop.permute.xlu0 %1092
    %v1095 = vperm.slane %v993, 0
    %v1096 = vmul.f32 %v1089, %v1095
    %v1097 = vmul.f32 %v1093, %v1095
    %1098 = vset.pattern.permute.xlu0 9
    %1099 = vperm.xlu0 %1098, %v995
    %v1100 = vpop.permute.xlu0 %1099
    %1102 = vset.pattern.permute.xlu0 9
    %1103 = vperm.xlu0 %1102, %v996
    %v1104 = vpop.permute.xlu0 %1103
    %v1106 = vperm.slane %v993, 1
    %v1107 = vmul.f32 %v1100, %v1106
    %v1108 = vmul.f32 %v1104, %v1106
    %v1109 = vadd.f32 %v1008, %v1019
    %v1110 = vadd.f32 %v1009, %v1020
    %v1111 = vadd.f32 %v1030, %v1041
    %v1112 = vadd.f32 %v1031, %v1042
    %v1113 = vadd.f32 %v1052, %v1063
    %v1114 = vadd.f32 %v1053, %v1064
    %v1115 = vadd.f32 %v1074, %v1085
    %v1116 = vadd.f32 %v1075, %v1086
    %v1117 = vadd.f32 %v1096, %v1107
    %v1118 = vadd.f32 %v1097, %v1108
    %v1119 = vadd.f32 %v1109, %v1111
    %v1120 = vadd.f32 %v1110, %v1112
    %v1121 = vadd.f32 %v1113, %v1115
    %v1122 = vadd.f32 %v1114, %v1116
    %v1123 = vadd.f32 %v1119, %v1121
    %v1124 = vadd.f32 %v1120, %v1122
    %v1125 = vadd.f32 %v1123, %v1117
    %v1126 = vadd.f32 %v1124, %v1118
    %1127 = vset.pattern.permute.xlu0 6
    %1128 = vperm.xlu0 %1127, %v217
    %v1129 = vpop.permute.xlu0 %1128
    %1131 = vset.pattern.permute.xlu0 6
    %1132 = vperm.xlu0 %1131, %v218
    %v1133 = vpop.permute.xlu0 %1132
    %v1135 = vadd.f32 %v1125, %v1129
    %v1136 = vadd.f32 %v1126, %v1133
    %v1137 = vmul.f32 %v1135, 0.5
    %v1138 = vmul.f32 %v1136, 0.5
    %v1139 = vtanh.pop %v1137
    %v1140 = vtanh.pop %v1138
    %v1141 = vmul.f32 %v1139, 0.5
    %v1142 = vmul.f32 %v1140, 0.5
    %v1143 = vadd.f32 %v1141, 0.5
    %v1144 = vadd.f32 %v1142, 0.5
    %s1145 = scalar_lea.vmem [#allocation3], 112
    %v1146 = vld [vmem:[%s1145] sm:$0xff]
    %v1147 = vld [vmem:[%s1145 + $0x8] sm:$0x3]
    %1149 = vset.pattern.permute.xlu0 0
    %1150 = vperm.xlu0 %1149, %v1146
    %v1151 = vpop.permute.xlu0 %1150
    %1154 = vset.pattern.permute.xlu0 0
    %1155 = vperm.xlu0 %1154, %v1147
    %v1156 = vpop.permute.xlu0 %1155
    %v1158 = vperm.slane %v1143, 0
    %v1159 = vmul.f32 %v1151, %v1158
    %v1160 = vmul.f32 %v1156, %v1158
    %1161 = vset.pattern.permute.xlu0 1
    %1162 = vperm.xlu0 %1161, %v1146
    %v1163 = vpop.permute.xlu0 %1162
    %1165 = vset.pattern.permute.xlu0 1
    %1166 = vperm.xlu0 %1165, %v1147
    %v1167 = vpop.permute.xlu0 %1166
    %v1169 = vperm.slane %v1143, 1
    %v1170 = vmul.f32 %v1163, %v1169
    %v1171 = vmul.f32 %v1167, %v1169
    %1172 = vset.pattern.permute.xlu0 2
    %1173 = vperm.xlu0 %1172, %v1146
    %v1174 = vpop.permute.xlu0 %1173
    %1176 = vset.pattern.permute.xlu0 2
    %1177 = vperm.xlu0 %1176, %v1147
    %v1178 = vpop.permute.xlu0 %1177
    %v1180 = vperm.slane %v1143, 2
    %v1181 = vmul.f32 %v1174, %v1180
    %v1182 = vmul.f32 %v1178, %v1180
    %1183 = vset.pattern.permute.xlu0 3
    %1184 = vperm.xlu0 %1183, %v1146
    %v1185 = vpop.permute.xlu0 %1184
    %1187 = vset.pattern.permute.xlu0 3
    %1188 = vperm.xlu0 %1187, %v1147
    %v1189 = vpop.permute.xlu0 %1188
    %v1191 = vperm.slane %v1143, 3
    %v1192 = vmul.f32 %v1185, %v1191
    %v1193 = vmul.f32 %v1189, %v1191
    %1194 = vset.pattern.permute.xlu0 4
    %1195 = vperm.xlu0 %1194, %v1146
    %v1196 = vpop.permute.xlu0 %1195
    %1198 = vset.pattern.permute.xlu0 4
    %1199 = vperm.xlu0 %1198, %v1147
    %v1200 = vpop.permute.xlu0 %1199
    %v1202 = vperm.slane %v1143, 4
    %v1203 = vmul.f32 %v1196, %v1202
    %v1204 = vmul.f32 %v1200, %v1202
    %1205 = vset.pattern.permute.xlu0 5
    %1206 = vperm.xlu0 %1205, %v1146
    %v1207 = vpop.permute.xlu0 %1206
    %1209 = vset.pattern.permute.xlu0 5
    %1210 = vperm.xlu0 %1209, %v1147
    %v1211 = vpop.permute.xlu0 %1210
    %v1213 = vperm.slane %v1143, 5
    %v1214 = vmul.f32 %v1207, %v1213
    %v1215 = vmul.f32 %v1211, %v1213
    %1216 = vset.pattern.permute.xlu0 6
    %1217 = vperm.xlu0 %1216, %v1146
    %v1218 = vpop.permute.xlu0 %1217
    %1220 = vset.pattern.permute.xlu0 6
    %1221 = vperm.xlu0 %1220, %v1147
    %v1222 = vpop.permute.xlu0 %1221
    %v1224 = vperm.slane %v1143, 6
    %v1225 = vmul.f32 %v1218, %v1224
    %v1226 = vmul.f32 %v1222, %v1224
    %1227 = vset.pattern.permute.xlu0 7
    %1228 = vperm.xlu0 %1227, %v1146
    %v1229 = vpop.permute.xlu0 %1228
    %1231 = vset.pattern.permute.xlu0 7
    %1232 = vperm.xlu0 %1231, %v1147
    %v1233 = vpop.permute.xlu0 %1232
    %v1235 = vperm.slane %v1143, 7
    %v1236 = vmul.f32 %v1229, %v1235
    %v1237 = vmul.f32 %v1233, %v1235
    %1238 = vset.pattern.permute.xlu0 8
    %1239 = vperm.xlu0 %1238, %v1146
    %v1240 = vpop.permute.xlu0 %1239
    %1242 = vset.pattern.permute.xlu0 8
    %1243 = vperm.xlu0 %1242, %v1147
    %v1244 = vpop.permute.xlu0 %1243
    %v1246 = vperm.slane %v1144, 0
    %v1247 = vmul.f32 %v1240, %v1246
    %v1248 = vmul.f32 %v1244, %v1246
    %1249 = vset.pattern.permute.xlu0 9
    %1250 = vperm.xlu0 %1249, %v1146
    %v1251 = vpop.permute.xlu0 %1250
    %1253 = vset.pattern.permute.xlu0 9
    %1254 = vperm.xlu0 %1253, %v1147
    %v1255 = vpop.permute.xlu0 %1254
    %v1257 = vperm.slane %v1144, 1
    %v1258 = vmul.f32 %v1251, %v1257
    %v1259 = vmul.f32 %v1255, %v1257
    %v1260 = vadd.f32 %v1159, %v1170
    %v1261 = vadd.f32 %v1160, %v1171
    %v1262 = vadd.f32 %v1181, %v1192
    %v1263 = vadd.f32 %v1182, %v1193
    %v1264 = vadd.f32 %v1203, %v1214
    %v1265 = vadd.f32 %v1204, %v1215
    %v1266 = vadd.f32 %v1225, %v1236
    %v1267 = vadd.f32 %v1226, %v1237
    %v1268 = vadd.f32 %v1247, %v1258
    %v1269 = vadd.f32 %v1248, %v1259
    %v1270 = vadd.f32 %v1260, %v1262
    %v1271 = vadd.f32 %v1261, %v1263
    %v1272 = vadd.f32 %v1264, %v1266
    %v1273 = vadd.f32 %v1265, %v1267
    %v1274 = vadd.f32 %v1270, %v1272
    %v1275 = vadd.f32 %v1271, %v1273
    %v1276 = vadd.f32 %v1274, %v1268
    %v1277 = vadd.f32 %v1275, %v1269
    %1278 = vset.pattern.permute.xlu0 7
    %1279 = vperm.xlu0 %1278, %v217
    %v1280 = vpop.permute.xlu0 %1279
    %1282 = vset.pattern.permute.xlu0 7
    %1283 = vperm.xlu0 %1282, %v218
    %v1284 = vpop.permute.xlu0 %1283
    %v1286 = vadd.f32 %v1276, %v1280
    %v1287 = vadd.f32 %v1277, %v1284
    %v1288 = vmul.f32 %v1286, 0.5
    %v1289 = vmul.f32 %v1287, 0.5
    %v1290 = vtanh.pop %v1288
    %v1291 = vtanh.pop %v1289
    %v1292 = vmul.f32 %v1290, 0.5
    %v1293 = vmul.f32 %v1291, 0.5
    %v1294 = vadd.f32 %v1292, 0.5
    %v1295 = vadd.f32 %v1293, 0.5
    %s1296 = scalar_lea.vmem [#allocation3], 128
    %v1297 = vld [vmem:[%s1296] sm:$0xff]
    %v1298 = vld [vmem:[%s1296 + $0x8] sm:$0x3]
    %1300 = vset.pattern.permute.xlu0 0
    %1301 = vperm.xlu0 %1300, %v1297
    %v1302 = vpop.permute.xlu0 %1301
    %1305 = vset.pattern.permute.xlu0 0
    %1306 = vperm.xlu0 %1305, %v1298
    %v1307 = vpop.permute.xlu0 %1306
    %v1309 = vperm.slane %v1294, 0
    %v1310 = vmul.f32 %v1302, %v1309
    %v1311 = vmul.f32 %v1307, %v1309
    %1312 = vset.pattern.permute.xlu0 1
    %1313 = vperm.xlu0 %1312, %v1297
    %v1314 = vpop.permute.xlu0 %1313
    %1316 = vset.pattern.permute.xlu0 1
    %1317 = vperm.xlu0 %1316, %v1298
    %v1318 = vpop.permute.xlu0 %1317
    %v1320 = vperm.slane %v1294, 1
    %v1321 = vmul.f32 %v1314, %v1320
    %v1322 = vmul.f32 %v1318, %v1320
    %1323 = vset.pattern.permute.xlu0 2
    %1324 = vperm.xlu0 %1323, %v1297
    %v1325 = vpop.permute.xlu0 %1324
    %1327 = vset.pattern.permute.xlu0 2
    %1328 = vperm.xlu0 %1327, %v1298
    %v1329 = vpop.permute.xlu0 %1328
    %v1331 = vperm.slane %v1294, 2
    %v1332 = vmul.f32 %v1325, %v1331
    %v1333 = vmul.f32 %v1329, %v1331
    %1334 = vset.pattern.permute.xlu0 3
    %1335 = vperm.xlu0 %1334, %v1297
    %v1336 = vpop.permute.xlu0 %1335
    %1338 = vset.pattern.permute.xlu0 3
    %1339 = vperm.xlu0 %1338, %v1298
    %v1340 = vpop.permute.xlu0 %1339
    %v1342 = vperm.slane %v1294, 3
    %v1343 = vmul.f32 %v1336, %v1342
    %v1344 = vmul.f32 %v1340, %v1342
    %1345 = vset.pattern.permute.xlu0 4
    %1346 = vperm.xlu0 %1345, %v1297
    %v1347 = vpop.permute.xlu0 %1346
    %1349 = vset.pattern.permute.xlu0 4
    %1350 = vperm.xlu0 %1349, %v1298
    %v1351 = vpop.permute.xlu0 %1350
    %v1353 = vperm.slane %v1294, 4
    %v1354 = vmul.f32 %v1347, %v1353
    %v1355 = vmul.f32 %v1351, %v1353
    %1356 = vset.pattern.permute.xlu0 5
    %1357 = vperm.xlu0 %1356, %v1297
    %v1358 = vpop.permute.xlu0 %1357
    %1360 = vset.pattern.permute.xlu0 5
    %1361 = vperm.xlu0 %1360, %v1298
    %v1362 = vpop.permute.xlu0 %1361
    %v1364 = vperm.slane %v1294, 5
    %v1365 = vmul.f32 %v1358, %v1364
    %v1366 = vmul.f32 %v1362, %v1364
    %1367 = vset.pattern.permute.xlu0 6
    %1368 = vperm.xlu0 %1367, %v1297
    %v1369 = vpop.permute.xlu0 %1368
    %1371 = vset.pattern.permute.xlu0 6
    %1372 = vperm.xlu0 %1371, %v1298
    %v1373 = vpop.permute.xlu0 %1372
    %v1375 = vperm.slane %v1294, 6
    %v1376 = vmul.f32 %v1369, %v1375
    %v1377 = vmul.f32 %v1373, %v1375
    %1378 = vset.pattern.permute.xlu0 7
    %1379 = vperm.xlu0 %1378, %v1297
    %v1380 = vpop.permute.xlu0 %1379
    %1382 = vset.pattern.permute.xlu0 7
    %1383 = vperm.xlu0 %1382, %v1298
    %v1384 = vpop.permute.xlu0 %1383
    %v1386 = vperm.slane %v1294, 7
    %v1387 = vmul.f32 %v1380, %v1386
    %v1388 = vmul.f32 %v1384, %v1386
    %1389 = vset.pattern.permute.xlu0 8
    %1390 = vperm.xlu0 %1389, %v1297
    %v1391 = vpop.permute.xlu0 %1390
    %1393 = vset.pattern.permute.xlu0 8
    %1394 = vperm.xlu0 %1393, %v1298
    %v1395 = vpop.permute.xlu0 %1394
    %v1397 = vperm.slane %v1295, 0
    %v1398 = vmul.f32 %v1391, %v1397
    %v1399 = vmul.f32 %v1395, %v1397
    %1400 = vset.pattern.permute.xlu0 9
    %1401 = vperm.xlu0 %1400, %v1297
    %v1402 = vpop.permute.xlu0 %1401
    %1404 = vset.pattern.permute.xlu0 9
    %1405 = vperm.xlu0 %1404, %v1298
    %v1406 = vpop.permute.xlu0 %1405
    %v1408 = vperm.slane %v1295, 1
    %v1409 = vmul.f32 %v1402, %v1408
    %v1410 = vmul.f32 %v1406, %v1408
    %v1411 = vadd.f32 %v1310, %v1321
    %v1412 = vadd.f32 %v1311, %v1322
    %v1413 = vadd.f32 %v1332, %v1343
    %v1414 = vadd.f32 %v1333, %v1344
    %v1415 = vadd.f32 %v1354, %v1365
    %v1416 = vadd.f32 %v1355, %v1366
    %v1417 = vadd.f32 %v1376, %v1387
    %v1418 = vadd.f32 %v1377, %v1388
    %v1419 = vadd.f32 %v1398, %v1409
    %v1420 = vadd.f32 %v1399, %v1410
    %v1421 = vadd.f32 %v1411, %v1413
    %v1422 = vadd.f32 %v1412, %v1414
    %v1423 = vadd.f32 %v1415, %v1417
    %v1424 = vadd.f32 %v1416, %v1418
    %v1425 = vadd.f32 %v1421, %v1423
    %v1426 = vadd.f32 %v1422, %v1424
    %v1427 = vadd.f32 %v1425, %v1419
    %v1428 = vadd.f32 %v1426, %v1420
    %1429 = vset.pattern.permute.xlu0 8
    %1430 = vperm.xlu0 %1429, %v217
    %v1431 = vpop.permute.xlu0 %1430
    %1433 = vset.pattern.permute.xlu0 8
    %1434 = vperm.xlu0 %1433, %v218
    %v1435 = vpop.permute.xlu0 %1434
    %v1437 = vadd.f32 %v1427, %v1431
    %v1438 = vadd.f32 %v1428, %v1435
    %v1439 = vmul.f32 %v1437, 0.5
    %v1440 = vmul.f32 %v1438, 0.5
    %v1441 = vtanh.pop %v1439
    %v1442 = vtanh.pop %v1440
    %v1443 = vmul.f32 %v1441, 0.5
    %v1444 = vmul.f32 %v1442, 0.5
    %v1445 = vadd.f32 %v1443, 0.5
    %v1446 = vadd.f32 %v1444, 0.5
    %v1447 = vld [vmem:[%s5] sm:$0xff]
    %v1448 = vld [vmem:[%s5 + $0x8] sm:$0x3]
    %1450 = vset.pattern.permute.xlu0 0
    %1451 = vperm.xlu0 %1450, %v1447
    %v1452 = vpop.permute.xlu0 %1451
    %1455 = vset.pattern.permute.xlu0 0
    %1456 = vperm.xlu0 %1455, %v1448
    %v1457 = vpop.permute.xlu0 %1456
    %v1459 = vmul.f32 %v1445, %v1452
    %v1460 = vmul.f32 %v1446, %v1457
    %vm1461 = vcmask 1041408
    %v1462 = vsel %vm1461, %v1460, 0.0
    %v1463 = vadd.f32 %v1459, %v1462
    %v1464 = vrot.slane %v1463, 4
    %v1465 = vadd.f32 %v1463, %v1464
    %v1466 = vrot.slane %v1465, 2
    %v1467 = vadd.f32 %v1465, %v1466
    %v1468 = vrot.slane %v1467, 1
    %v1469 = vadd.f32 %v1467, %v1468
    %v1470 = vld [vmem:[#allocation2] sm:$0x1]
    %1472 = vset.pattern.permute.xlu0 0
    %1473 = vperm.xlu0 %1472, %v1470
    %v1474 = vpop.permute.xlu0 %1473
    %v1476 = vperm.slane %v1474, 0
    %v1477 = vadd.f32 %v1469, %v1476
    %1478 = vst [vmem:[#allocation6] sm:$0x1] %v1477
    // Predicated region
    $region34: #{tpu_custom_call.1} parent=1 // pred_check
      _
    $region35: #{tpu_custom_call.1} parent=1 // pred_check_branch
      %1480 = sbr.rel (0) target = $region37
    $region36: #{tpu_custom_call.1} parent=1 // pred_region
      %1482 = vsyncadd [#allocation5], 0
      %s1484 = sshll.u32 [#allocation6], 4
      %s1485 = int_to_ptr.vmem [resolvable:$true] %s1484
      %s1486 = sshll.u32 %s7, 4
      %s1487 = int_to_ptr.hbm [resolvable:$true] %s1486
      %1489 = dma.vmem_to_hbm [thread:$0]  %s1485, 16, %s1487, [#allocation5]
    $region37: #{tpu_custom_call.1} parent=1 // pred_fallthru
      _
    // Predicated region
    $region38: #{tpu_custom_call.1} parent=1 // pred_check
      _
    $region39: #{tpu_custom_call.1} parent=1 // pred_check_branch
      %1491 = sbr.rel (0) target = $region41
    $region40: #{tpu_custom_call.1} parent=1 // pred_region
      %1493 = dma.done [#allocation5], 16
    $region41: #{tpu_custom_call.1} parent=1 // pred_fallthru
      _
    %1494 = vsyncpa [#allocation4], 1
    %1495 = vsyncpa [#allocation5], 1

</llo_original>
